<compile_context>
chip_gen: v5e
topology: v5e:2x2
jax: 0.10.0
libtpu: 0.0.40
codegen_flags: <defaults>
</compile_context>

<pallas_src>
import functools

import jax
import jax.numpy as jnp
from jax.experimental import pallas as pl
from jax.experimental.pallas import tpu as pltpu


# ---------------------------------------------------------------------------
# Tile-size helpers.
# ---------------------------------------------------------------------------
def _round_up(x, m):
    return ((x + m - 1) // m) * m


def _pick_tile(dim, cap, align):
    """Largest tile t <= cap with t % align == 0 and t dividing dim.

    `dim` is assumed to already be a multiple of `align`; if dim <= cap the full
    dimension is used as a single block (bypasses the (8,128) tiling constraint
    and avoids padding)."""
    if dim <= cap:
        return dim
    t = (cap // align) * align
    while t > align:
        if dim % t == 0:
            return t
        t -= align
    return align


# ---------------------------------------------------------------------------
# Fused matmul + bias (+ optional ReLU) Pallas kernel.  bf16 MXU inputs,
# f32 accumulator scratch, f32 epilogue.
# ---------------------------------------------------------------------------
def _mm_kernel(a_ref, b_ref, bias_ref, o_ref, acc_ref, *, apply_relu):
    @pl.when(pl.program_id(2) == 0)
    def _():
        acc_ref[...] = jnp.zeros_like(acc_ref)

    acc_ref[...] += jnp.dot(a_ref[...], b_ref[...],
                            preferred_element_type=jnp.float32)

    @pl.when(pl.program_id(2) == pl.num_programs(2) - 1)
    def _():
        r = acc_ref[...] + bias_ref[...]          # f32 epilogue (v5e VPU has no bf16)
        if apply_relu:
            r = jnp.maximum(r, 0.0)
        o_ref[...] = r.astype(o_ref.dtype)


def matmul_bias(a, b, bias, *, relu, out_dtype,
                tm_cap=512, tn_cap=1024, tk_cap=4096):
    """a:(M,K) @ b:(K,N) + bias:(N,), optional ReLU.  Minimal padding, large tiles."""
    M, K = a.shape
    K2, N = b.shape
    assert K == K2

    Mp = _round_up(M, 8)
    Kp = _round_up(K, 128)
    Np = _round_up(N, 128)

    tm = _pick_tile(Mp, tm_cap, 8)
    tk = _pick_tile(Kp, tk_cap, 128)
    tn = _pick_tile(Np, tn_cap, 128)
    Mp = _round_up(Mp, tm)
    Kp = _round_up(Kp, tk)
    Np = _round_up(Np, tn)

    a_p = a if (Mp == M and Kp == K) else jnp.pad(a, ((0, Mp - M), (0, Kp - K)))
    b_p = b if (Kp == K and Np == N) else jnp.pad(b, ((0, Kp - K), (0, Np - N)))
    bias_p = (bias if Np == N else jnp.pad(bias, (0, Np - N))).reshape(1, Np)

    a_p = a_p.astype(jnp.bfloat16)
    b_p = b_p.astype(jnp.bfloat16)
    bias_p = bias_p.astype(jnp.float32)

    grid = (Mp // tm, Np // tn, Kp // tk)

    out = pl.pallas_call(
        functools.partial(_mm_kernel, apply_relu=relu),
        out_shape=jax.ShapeDtypeStruct((Mp, Np), out_dtype),
        grid_spec=pltpu.PrefetchScalarGridSpec(
            num_scalar_prefetch=0,
            grid=grid,
            in_specs=[
                pl.BlockSpec((tm, tk), lambda i, j, k: (i, k)),
                pl.BlockSpec((tk, tn), lambda i, j, k: (k, j)),
                pl.BlockSpec((1, tn), lambda i, j, k: (0, j)),
            ],
            out_specs=pl.BlockSpec((tm, tn), lambda i, j, k: (i, j)),
            scratch_shapes=[pltpu.VMEM((tm, tn), jnp.float32)],
        ),
        compiler_params=pltpu.CompilerParams(
            dimension_semantics=("parallel", "parallel", "arbitrary"),
            vmem_limit_bytes=40 * 1024 * 1024),
    )(a_p, b_p, bias_p)

    if Mp != M or Np != N:
        out = out[:M, :N]
    return out


# ---------------------------------------------------------------------------
# 2x2 stride-2 max pool: tiled Pallas elementwise 4-way max over strided views.
# ---------------------------------------------------------------------------
def _max4_kernel(a_ref, b_ref, c_ref, d_ref, o_ref):
    o_ref[...] = jnp.maximum(jnp.maximum(a_ref[...], b_ref[...]),
                             jnp.maximum(c_ref[...], d_ref[...]))


def maxpool2x2(x):
    # x: (N, H, W, C) with even H, W (matches PyTorch MaxPool2d(2,2) on even sizes).
    N, H, W, C = x.shape
    Ho, Wo = H // 2, W // 2
    R = N * Ho * Wo
    v00 = x[:, 0::2, 0::2, :].reshape(R, C)
    v01 = x[:, 0::2, 1::2, :].reshape(R, C)
    v10 = x[:, 1::2, 0::2, :].reshape(R, C)
    v11 = x[:, 1::2, 1::2, :].reshape(R, C)
    # TODO(synk): read the 2x2 window directly inside the kernel (strided ref loads)
    # to avoid the four strided-view copies in HBM.
    tr = _pick_tile(R, 1024, 8) if R % 8 == 0 else R
    spec = pl.BlockSpec((tr, C), lambda i: (i, 0))
    out = pl.pallas_call(
        _max4_kernel,
        out_shape=jax.ShapeDtypeStruct((R, C), x.dtype),
        grid_spec=pltpu.PrefetchScalarGridSpec(
            num_scalar_prefetch=0,
            grid=(R // tr,),
            in_specs=[spec, spec, spec, spec],
            out_specs=spec,
        ),
        compiler_params=pltpu.CompilerParams(
            dimension_semantics=("parallel",),
            vmem_limit_bytes=40 * 1024 * 1024),
    )(v00, v01, v10, v11)
    return out.reshape(N, Ho, Wo, C)


# ---------------------------------------------------------------------------
# 3x3 'same' conv + ReLU via im2col (glue) + Pallas matmul (hot path).
# ---------------------------------------------------------------------------
def conv3x3_same_relu(x, w_flat, bias):
    # x: (N,H,W,Cin) bf16; w_flat: (9*Cin, Cout) bf16, row ordering = (kh, kw, cin)
    N, H, W, Cin = x.shape
    xp = jnp.pad(x, ((0, 0), (1, 1), (1, 1), (0, 0)))
    cols = [xp[:, kh:kh + H, kw:kw + W, :]
            for kh in range(3) for kw in range(3)]
    patches = jnp.concatenate(cols, axis=-1)              # (N,H,W,9*Cin)
    a = patches.reshape(N * H * W, 9 * Cin)
    # TODO(synk): fuse im2col into the matmul kernel (read shifted HBM windows per
    # tap inside the kernel) to avoid materializing the 9x patches tensor.
    out = matmul_bias(a, w_flat, bias, relu=True, out_dtype=jnp.bfloat16)
    return out.reshape(N, H, W, w_flat.shape[1])


# ---------------------------------------------------------------------------
# Parameter construction (deterministic, He-style scaling, bf16 weights).
# ---------------------------------------------------------------------------
CONV_CFG = [
    (3, 64), (64, 64),                                     # layer1
    (64, 128), (128, 128),                                 # layer2
    (128, 256), (256, 256), (256, 256), (256, 256),        # layer3
    (256, 512), (512, 512), (512, 512), (512, 512),        # layer4
    (512, 512), (512, 512), (512, 512), (512, 512),        # layer5
]
CONVS_PER_STAGE = [2, 2, 4, 4, 4]
FC_CFG = [(512 * 7 * 7, 4096), (4096, 4096), (4096, 10)]


def init_params(key):
    params = {"convs": [], "fcs": []}
    for cin, cout in CONV_CFG:
        key, kw, kb = jax.random.split(key, 3)
        fan_in = 9 * cin
        w = jax.random.normal(kw, (3, 3, cin, cout), jnp.float32)
        w = w * jnp.sqrt(2.0 / fan_in)
        w_flat = w.reshape(9 * cin, cout).astype(jnp.bfloat16)   # (kh,kw,cin) rows
        b = 0.01 * jax.random.normal(kb, (cout,), jnp.float32)
        params["convs"].append((w_flat, b))
    for fin, fout in FC_CFG:
        key, kw, kb = jax.random.split(key, 3)
        w = (jax.random.normal(kw, (fin, fout), jnp.float32)
             * jnp.sqrt(2.0 / fin)).astype(jnp.bfloat16)
        b = 0.01 * jax.random.normal(kb, (fout,), jnp.float32)
        params["fcs"].append((w, b))
    return params


# ---------------------------------------------------------------------------
# Full forward pass.
# ---------------------------------------------------------------------------
def vgg_forward(x_nchw, params):
    # Accept PyTorch NCHW input, compute in NHWC / bf16.
    x = jnp.transpose(x_nchw, (0, 2, 3, 1)).astype(jnp.bfloat16)

    idx = 0
    for n_convs in CONVS_PER_STAGE:
        for _ in range(n_convs):
            w_flat, b = params["convs"][idx]
            idx += 1
            x = conv3x3_same_relu(x, w_flat, b)
        x = maxpool2x2(x)

    # AdaptiveAvgPool2d((7,7)).  With the 32x32 input the feature map is 1x1 here,
    # so every 7x7 output bin averages that single pixel (exact PyTorch semantics
    # for input_size=1, output_size=7).
    N, H, W, C = x.shape
    assert H == 1 and W == 1
    # TODO(synk): general adaptive-avg-pool bin logic for arbitrary H,W not implemented.
    x = jnp.broadcast_to(x, (N, 7, 7, C))

    # Flatten with PyTorch (N, C, H, W) ordering.
    x = jnp.transpose(x, (0, 3, 1, 2)).reshape(N, -1)      # (N, 512*7*7)

    (w1, b1), (w2, b2), (w3, b3) = params["fcs"]
    x = matmul_bias(x, w1, b1, relu=True, out_dtype=jnp.bfloat16)
    x = matmul_bias(x, w2, b2, relu=True, out_dtype=jnp.bfloat16)
    x = matmul_bias(x, w3, b3, relu=False, out_dtype=jnp.float32)
    return x                                               # (N, 10)


if __name__ == "__main__":
    key = jax.random.PRNGKey(0)
    k_x, k_p = jax.random.split(key)
    # batch=2, 3 channels, 32x32 spatial (32 -> 16 -> 8 -> 4 -> 2 -> 1 through pools).
    x = jax.random.normal(k_x, (2, 3, 32, 32), jnp.float32)
    params = init_params(k_p)

    out = vgg_forward(x, params)
    out = jax.block_until_ready(out)
    assert out.shape == (2, 10)
    assert bool(jnp.all(jnp.isfinite(out)))
    print("KERNEL_OK")
</pallas_src>

<mosaic_0001>
module attributes {stable_mosaic.version = 11 : i64} {
  func.func @_mm_kernel(%arg0: i32, %arg1: i32, %arg2: i32, %arg3: memref<512x128xbf16, #tpu.memory_space<vmem>>, %arg4: memref<128x128xbf16, #tpu.memory_space<vmem>>, %arg5: memref<1x128xf32, #tpu.memory_space<vmem>>, %arg6: memref<512x128xbf16, #tpu.memory_space<vmem>>, %arg7: memref<512x128xf32, #tpu.memory_space<vmem>>) attributes {dimension_semantics = [#tpu.dimension_semantics<parallel>, #tpu.dimension_semantics<parallel>, #tpu.dimension_semantics<arbitrary>], iteration_bounds = array<i64: 4, 1, 1>, scalar_prefetch = 0 : i64, scratch_operands = 1 : i64, tpu.core_type = #tpu.core_type<tc>, window_params = [{transform_indices = @transform_0, window_bounds = array<i64: 512, 128>}, {transform_indices = @transform_1, window_bounds = array<i64: 128, 128>}, {transform_indices = @transform_2, window_bounds = array<i64: 1, 128>}, {transform_indices = @transform_3, window_bounds = array<i64: 512, 128>}]} {
    %c0_i32 = arith.constant 0 : i32
    %0 = arith.cmpi eq, %arg2, %c0_i32 : i32
    %1 = arith.extui %0 : i1 to i32
    %c0_i32_0 = arith.constant 0 : i32
    %2 = arith.cmpi ne, %1, %c0_i32_0 : i32
    scf.if %2 {
      %cst_10 = arith.constant 0.000000e+00 : f32
      %12 = vector.broadcast %cst_10 : f32 to vector<512x128xf32>
      %c0_11 = arith.constant 0 : index
      %c0_12 = arith.constant 0 : index
      %13 = vector.load %arg7[%c0_11, %c0_12] : memref<512x128xf32, #tpu.memory_space<vmem>>, vector<512x128xf32>
      tpu.vector_store %arg7[%c0_11, %c0_12], %12 {strides = array<i32>} : memref<512x128xf32, #tpu.memory_space<vmem>>, vector<512x128xf32>,
    } else {
    }
    %c0 = arith.constant 0 : index
    %c0_1 = arith.constant 0 : index
    %3 = vector.load %arg7[%c0, %c0_1] : memref<512x128xf32, #tpu.memory_space<vmem>>, vector<512x128xf32>
    %c0_2 = arith.constant 0 : index
    %c0_3 = arith.constant 0 : index
    %4 = vector.load %arg3[%c0_2, %c0_3] : memref<512x128xbf16, #tpu.memory_space<vmem>>, vector<512x128xbf16>
    %c0_4 = arith.constant 0 : index
    %c0_5 = arith.constant 0 : index
    %5 = vector.load %arg4[%c0_4, %c0_5] : memref<128x128xbf16, #tpu.memory_space<vmem>>, vector<128x128xbf16>
    %cst = arith.constant dense<0.000000e+00> : vector<512x128xf32>
    %6 = tpu.matmul %4, %5, %cst {dimension_numbers = #tpu.dot_dimension_numbers<[1], [0], [0], [1], [0, 0, 1, 1], [], []>} : vector<512x128xbf16>, vector<128x128xbf16>, vector<512x128xf32> -> vector<512x128xf32>
    %7 = arith.addf %3, %6 : vector<512x128xf32>
    %c0_6 = arith.constant 0 : index
    %c0_7 = arith.constant 0 : index
    %8 = vector.load %arg7[%c0_6, %c0_7] : memref<512x128xf32, #tpu.memory_space<vmem>>, vector<512x128xf32>
    tpu.vector_store %arg7[%c0_6, %c0_7], %7 {strides = array<i32>} : memref<512x128xf32, #tpu.memory_space<vmem>>, vector<512x128xf32>,
    %c0_i32_8 = arith.constant 0 : i32
    %9 = arith.cmpi eq, %arg2, %c0_i32_8 : i32
    %10 = arith.extui %9 : i1 to i32
    %c0_i32_9 = arith.constant 0 : i32
    %11 = arith.cmpi ne, %10, %c0_i32_9 : i32
    scf.if %11 {
      %c0_10 = arith.constant 0 : index
      %c0_11 = arith.constant 0 : index
      %12 = vector.load %arg7[%c0_10, %c0_11] : memref<512x128xf32, #tpu.memory_space<vmem>>, vector<512x128xf32>
      %c0_12 = arith.constant 0 : index
      %c0_13 = arith.constant 0 : index
      %13 = vector.load %arg5[%c0_12, %c0_13] : memref<1x128xf32, #tpu.memory_space<vmem>>, vector<1x128xf32>
      %14 = vector.broadcast %13 : vector<1x128xf32> to vector<512x128xf32>
      %15 = arith.addf %12, %14 : vector<512x128xf32>
      %cst_14 = arith.constant 0.000000e+00 : f32
      %16 = vector.broadcast %cst_14 : f32 to vector<512x128xf32>
      %17 = arith.maximumf %15, %16 : vector<512x128xf32>
      %18 = arith.truncf %17 : vector<512x128xf32> to vector<512x128xbf16>
      %c0_15 = arith.constant 0 : index
      %c0_16 = arith.constant 0 : index
      %19 = vector.load %arg6[%c0_15, %c0_16] : memref<512x128xbf16, #tpu.memory_space<vmem>>, vector<512x128xbf16>
      tpu.vector_store %arg6[%c0_15, %c0_16], %18 {strides = array<i32>} : memref<512x128xbf16, #tpu.memory_space<vmem>>, vector<512x128xbf16>,
    } else {
    }
    return
  }
  func.func @transform_0(%arg0: i32, %arg1: i32, %arg2: i32) -> (i32, i32) {
    %c0_i32 = arith.constant 0 : i32
    return %arg0, %arg2 : i32, i32
  }
  func.func @transform_1(%arg0: i32, %arg1: i32, %arg2: i32) -> (i32, i32) {
    %c0_i32 = arith.constant 0 : i32
    return %arg2, %arg1 : i32, i32
  }
  func.func @transform_2(%arg0: i32, %arg1: i32, %arg2: i32) -> (i32, i32) {
    %c0_i32 = arith.constant 0 : i32
    %c0_i32_0 = arith.constant 0 : i32
    return %c0_i32, %arg1 : i32, i32
  }
  func.func @transform_3(%arg0: i32, %arg1: i32, %arg2: i32) -> (i32, i32) {
    %c0_i32 = arith.constant 0 : i32
    return %arg0, %arg1 : i32, i32
  }
}

</mosaic_0001>

<llo_original>
// kernel: tpu_custom_call.1
$region0: #{tpu_custom_call.1}
  #allocation0 [shape = 'u32[]', space=smem, size = 0x4, offset = 0x4, fixed_abs, tag = 'smem constant byte address 0x4 - core index']
  #allocation1 [shape = 'u32[72,128]{1,0:T(1,128)}', space=vmem, size = 0x9000, scoped, tag = 'internal scratch']
  #allocation2 [shape = 'f32[512,128]{1,0:T(8,128)}', space=vmem, size = 0x40000, scoped, tag = 'scratch operand']
  %s0 = inlined_call_operand.hbm [shape: bf16[2048,128], index: 0, kind: input, shape index: {}]
  %s1 = inlined_call_operand.hbm [shape: bf16[128,128], index: 1, kind: input, shape index: {}]
  %s2 = inlined_call_operand.vmem [shape: f32[1,128], index: 2, kind: input, shape index: {}]
  %s3 = inlined_call_operand.hbm [shape: bf16[2048,128], index: 3, kind: output, shape index: {}]
  %s4 = sld [smem:[#allocation0]]
  $region61: #{tpu_custom_call.1} parent=0
    _
  %s6 = ssub.s32 1, %s4
  %s7 = scalar_select 0, %s6, %s4
  $region1: #{tpu_custom_call.1} parent=0
    #allocation3 [shape = 'u8[262144]{0}', space=vmem, size = 0x40000, scoped, tag = 'input window, operand 0']
    #allocation4 [shape = 's32[2]{0}', space=sflag, size = 0x8, scoped, tag = 'scoped memory for tpu_custom_call.1']
    #allocation5 [shape = 's32[2]{0}', space=sflag, size = 0x8, scoped, tag = 'scoped memory for tpu_custom_call.1']
    #allocation6 [shape = 'u8[32768]{0}', space=vmem, size = 0x8000, scoped, tag = 'input window, operand 1, single buffered']
    #allocation7 [shape = 's32[1]{0}', space=sflag, size = 0x4, scoped, tag = 'scoped memory for tpu_custom_call.1']
    #allocation8 [shape = 'u8[262144]{0}', space=vmem, size = 0x40000, scoped, tag = 'output window, operand 0']
    %8 = vsyncpa [#allocation4], 0
    %s9 = scalar_lea.sflag [#allocation4], 1
    %10 = vsyncpa %s9, 0
    %11 = vsyncpa [#allocation7], 0
    %12 = vsyncpa [#allocation5], 0
    %s13 = scalar_lea.sflag [#allocation5], 1
    %14 = vsyncpa %s13, 0
    loop: start=0, step=1, limit=6
    $region2: #{tpu_custom_call.1} parent=1 // loop_pre_header
      _
    $region3: #{tpu_custom_call.1} parent=1 // loop_header
      %s16 = sphi 0, %s20
      %p17 = scmp.ge.s32.totalorder %s16, 6
      %s23 = sphi 0, %s42
      %s24 = sphi 0, %s38
      %s25 = sphi 0, %s34
      %s26 = sphi 0, %s23
      %s27 = sphi 0, %s24
      %s28 = sphi 0, %s25
      %s29 = sphi 0, %s26
      %s30 = sphi 0, %s27
      %s31 = sphi 0, %s28
      %s47 = sphi 0, %s49
      %s50 = sphi 0, %s47
      %s51 = sphi 0, %s50
      %s67 = sphi 0, %s51
      %s75 = sphi 0, %s77
      %s78 = sphi 0, %s75
      %s79 = sphi 0, %s78
      %s95 = sphi 0, %s79
      %s101 = sphi 0, %s103
      %s104 = sphi 0, %s101
      %s105 = sphi 0, %s104
      %s121 = sphi 0, %s105
      %s129 = sphi 0, %s131
      %s132 = sphi 0, %s129
      %s133 = sphi 0, %s132
      %s149 = sphi 0, %s133
    $region4: #{tpu_custom_call.1} parent=1 // loop_header_branch
      %19 = sbr.rel (%p17) target = $region8
    $region5: #{tpu_custom_call.1} parent=1 // loop_body
      %s21 = ssub.s32 %s16, 1
      %s22 = ssub.s32 %s16, 2
      %s32 = sadd.s32 1, %s25
      %p33 = scmp.ge.s32.totalorder %s32, 1
      %s34 = scalar_select %p33, 0, %s32
      %s35 = sadd.s32 1, %s24
      %s36 = scalar_select %p33, %s35, %s24
      %p37 = scmp.ge.s32.totalorder %s36, 1
      %s38 = scalar_select %p37, 0, %s36
      %s39 = sadd.s32 1, %s23
      %s40 = scalar_select %p37, %s39, %s23
      %p41 = scmp.ge.s32.totalorder %s40, 4
      %s42 = scalar_select %p41, 0, %s40
      %s43 = ssub.s32 %s23, %s42
      %s44 = ssub.s32 %s25, %s34
      %s45 = sor.u32 %s43, %s44
      %p46 = scmp.eq.s32.totalorder %s45, 0
      %s48 = sadd.s32 %s47, 1
      %s49 = scalar_select %p46, %s47, %s48
      %p52 = pneg %p46
      %p53 = scmp.eq.s32.totalorder %s16, 3
      %p54 = por %p52, %p53
      %p55 = scmp.ne.s32.totalorder %s47, %s50
      %p56 = scmp.eq.s32.totalorder %s16, 0
      %p57 = por %p55, %p56
      %p58 = scmp.ne.s32.totalorder %s47, %s50
      %p59 = scmp.eq.s32.totalorder %s21, 3
      %p60 = por %p58, %p59
      %p61 = scmp.ne.s32.totalorder %s50, %s51
      %p62 = scmp.eq.s32.totalorder %s21, 0
      %p63 = por %p61, %p62
      %p64 = scmp.ne.s32.totalorder %s50, %s51
      %p65 = scmp.eq.s32.totalorder %s22, 3
      %p66 = por %p64, %p65
      %p68 = scmp.ne.s32.totalorder %s51, %s67
      %p69 = scmp.eq.s32.totalorder %s22, 0
      %p70 = por %p68, %p69
      %s71 = ssub.s32 %s25, %s34
      %s72 = ssub.s32 %s24, %s38
      %s73 = sor.u32 %s71, %s72
      %p74 = scmp.eq.s32.totalorder %s73, 0
      %s76 = sadd.s32 %s75, 1
      %s77 = scalar_select %p74, %s75, %s76
      %p80 = pneg %p74
      %p81 = scmp.eq.s32.totalorder %s16, 3
      %p82 = por %p80, %p81
      %p83 = scmp.ne.s32.totalorder %s75, %s78
      %p84 = scmp.eq.s32.totalorder %s16, 0
      %p85 = por %p83, %p84
      %p86 = scmp.ne.s32.totalorder %s75, %s78
      %p87 = scmp.eq.s32.totalorder %s21, 3
      %p88 = por %p86, %p87
      %p89 = scmp.ne.s32.totalorder %s78, %s79
      %p90 = scmp.eq.s32.totalorder %s21, 0
      %p91 = por %p89, %p90
      %p92 = scmp.ne.s32.totalorder %s78, %s79
      %p93 = scmp.eq.s32.totalorder %s22, 3
      %p94 = por %p92, %p93
      %p96 = scmp.ne.s32.totalorder %s79, %s95
      %p97 = scmp.eq.s32.totalorder %s22, 0
      %p98 = por %p96, %p97
      %s99 = ssub.s32 %s24, %s38
      %p100 = scmp.eq.s32.totalorder %s99, 0
      %s102 = sadd.s32 %s101, 1
      %s103 = scalar_select %p100, %s101, %s102
      %p106 = pneg %p100
      %p107 = scmp.eq.s32.totalorder %s16, 3
      %p108 = por %p106, %p107
      %p109 = scmp.ne.s32.totalorder %s101, %s104
      %p110 = scmp.eq.s32.totalorder %s16, 0
      %p111 = por %p109, %p110
      %p112 = scmp.ne.s32.totalorder %s101, %s104
      %p113 = scmp.eq.s32.totalorder %s21, 3
      %p114 = por %p112, %p113
      %p115 = scmp.ne.s32.totalorder %s104, %s105
      %p116 = scmp.eq.s32.totalorder %s21, 0
      %p117 = por %p115, %p116
      %p118 = scmp.ne.s32.totalorder %s104, %s105
      %p119 = scmp.eq.s32.totalorder %s22, 3
      %p120 = por %p118, %p119
      %p122 = scmp.ne.s32.totalorder %s105, %s121
      %p123 = scmp.eq.s32.totalorder %s22, 0
      %p124 = por %p122, %p123
      %s125 = ssub.s32 %s23, %s42
      %s126 = ssub.s32 %s24, %s38
      %s127 = sor.u32 %s125, %s126
      %p128 = scmp.eq.s32.totalorder %s127, 0
      %s130 = sadd.s32 %s129, 1
      %s131 = scalar_select %p128, %s129, %s130
      %p134 = pneg %p128
      %p135 = scmp.eq.s32.totalorder %s16, 3
      %p136 = por %p134, %p135
      %p137 = scmp.ne.s32.totalorder %s129, %s132
      %p138 = scmp.eq.s32.totalorder %s16, 0
      %p139 = por %p137, %p138
      %p140 = scmp.ne.s32.totalorder %s129, %s132
      %p141 = scmp.eq.s32.totalorder %s21, 3
      %p142 = por %p140, %p141
      %p143 = scmp.ne.s32.totalorder %s132, %s133
      %p144 = scmp.eq.s32.totalorder %s21, 0
      %p145 = por %p143, %p144
      %p146 = scmp.ne.s32.totalorder %s132, %s133
      %p147 = scmp.eq.s32.totalorder %s22, 3
      %p148 = por %p146, %p147
      %p150 = scmp.ne.s32.totalorder %s133, %s149
      %p151 = scmp.eq.s32.totalorder %s22, 0
      %p152 = por %p150, %p151
      %p153 = scmp.le.s32.totalorder 1, %s16
      %p154 = scmp.lt.s32.totalorder %s16, 5
      %p155 = pnand %p153, %p154
      %p156 = pneg %p155
      // Predicated region
      $region9: #{tpu_custom_call.1} parent=5 // pred_check
        _
      $region10: #{tpu_custom_call.1} parent=5 // pred_check_branch
        %158 = sbr.rel (%p155) target = $region12
      $region11: #{tpu_custom_call.1} parent=5 // pred_region
        %s159 = ssub.s32 %s16, 1
        // Predicated region
        $region13: #{tpu_custom_call.1} parent=11 // pred_check
          %p160 = pneg %p91
        $region14: #{tpu_custom_call.1} parent=11 // pred_check_branch
          %162 = sbr.rel (%p160) target = $region16
        $region15: #{tpu_custom_call.1} parent=11 // pred_region
          %s163 = smul.u32 16, %s28
          %165 = vsyncadd [#allocation7], 0
          %s166 = sadd.s32 %s27, %s163
          %s167 = smul.addr %s166, 4
          %s168 = scalar_lea.hbm %s1, %s167
          %s169 = sshll.u32 %s168, 4
          %s170 = int_to_ptr.hbm [resolvable:$true] %s169
          %s171 = sshll.u32 [#allocation6], 4
          %s172 = int_to_ptr.vmem [resolvable:$true] %s171
          %177 = dma.hbm_to_vmem [thread:$0]  %s170, 1024, %s172, [#allocation7], 64, 64, 4
        $region16: #{tpu_custom_call.1} parent=11 // pred_fallthru
          _
        // Predicated region
        $region17: #{tpu_custom_call.1} parent=11 // pred_check
          %p178 = pneg %p117
        $region18: #{tpu_custom_call.1} parent=11 // pred_check_branch
          %180 = sbr.rel (%p178) target = $region20
        $region19: #{tpu_custom_call.1} parent=11 // pred_region
          %p181 = scmp.lt.s32.totalorder %s27, 0
          %s182 = scalar_select %p181, %s27, 0
          %s183 = scalar_lea.vmem %s2, %s182
        $region20: #{tpu_custom_call.1} parent=11 // pred_fallthru
          _
      $region12: #{tpu_custom_call.1} parent=5 // pred_fallthru
        _
      %p184 = scmp.lt.s32.totalorder %s16, 4
      // Predicated region
      $region21: #{tpu_custom_call.1} parent=5 // pred_check
        %p185 = pneg %p184
      $region22: #{tpu_custom_call.1} parent=5 // pred_check_branch
        %187 = sbr.rel (%p185) target = $region24
      $region23: #{tpu_custom_call.1} parent=5 // pred_region
        // Predicated region
        $region25: #{tpu_custom_call.1} parent=23 // pred_check
          %p188 = pneg %p57
        $region26: #{tpu_custom_call.1} parent=23 // pred_check_branch
          %190 = sbr.rel (%p188) target = $region28
        $region27: #{tpu_custom_call.1} parent=23 // pred_region
          %s191 = sand.u32 %s47, 1
          %s192 = scalar_lea.sflag [#allocation4], %s191
          %s193 = sand.u32 %s47, 1
          %s194 = smul.addr %s193, 256
          %s195 = scalar_lea.vmem [#allocation3], %s194
          %s196 = smul.u32 64, %s23
          %198 = vsyncadd %s192, 0
          %s199 = sadd.s32 %s25, %s196
          %s200 = smul.addr %s199, 4
          %s201 = scalar_lea.hbm %s0, %s200
          %s202 = sshll.u32 %s201, 4
          %s203 = int_to_ptr.hbm [resolvable:$true] %s202
          %s204 = sshll.u32 %s195, 4
          %s205 = int_to_ptr.vmem [resolvable:$true] %s204
          %210 = dma.hbm_to_vmem [thread:$0]  %s203, 4096, %s205, %s192, 64, 64, 4
        $region28: #{tpu_custom_call.1} parent=23 // pred_fallthru
          _
      $region24: #{tpu_custom_call.1} parent=5 // pred_fallthru
        _
      %p211 = scmp.le.s32.totalorder 1, %s16
      %p212 = scmp.lt.s32.totalorder %s16, 5
      %p213 = pnand %p211, %p212
      %p214 = pneg %p213
      // Predicated region
      $region29: #{tpu_custom_call.1} parent=5 // pred_check
        _
      $region30: #{tpu_custom_call.1} parent=5 // pred_check_branch
        %216 = sbr.rel (%p213) target = $region32
      $region31: #{tpu_custom_call.1} parent=5 // pred_region
        %s217 = ssub.s32 %s16, 1
        %s218 = sand.u32 %s50, 1
        %s219 = scalar_lea.sflag [#allocation4], %s218
        %s220 = sand.u32 %s50, 1
        %s221 = smul.addr %s220, 256
        %s222 = scalar_lea.vmem [#allocation3], %s221
        // Predicated region
        $region33: #{tpu_custom_call.1} parent=31 // pred_check
          %p223 = pneg %p63
        $region34: #{tpu_custom_call.1} parent=31 // pred_check_branch
          %225 = sbr.rel (%p223) target = $region36
        $region35: #{tpu_custom_call.1} parent=31 // pred_region
          %227 = dma.done %s219, 4096
        $region36: #{tpu_custom_call.1} parent=31 // pred_fallthru
          _
        // Predicated region
        $region37: #{tpu_custom_call.1} parent=31 // pred_check
          %p228 = pneg %p91
        $region38: #{tpu_custom_call.1} parent=31 // pred_check_branch
          %230 = sbr.rel (%p228) target = $region40
        $region39: #{tpu_custom_call.1} parent=31 // pred_region
          %232 = dma.done [#allocation7], 1024
        $region40: #{tpu_custom_call.1} parent=31 // pred_fallthru
          _
        %s233 = sand.u32 %s50, 1
        %s234 = scalar_lea.sflag [#allocation4], %s233
        %s235 = sand.u32 %s50, 1
        %s236 = smul.addr %s235, 256
        %s237 = scalar_lea.vmem [#allocation3], %s236
        %p238 = pneg %p63
        %p239 = pneg %p60
        %p240 = pneg %p91
        %p241 = pneg %p88
        %p242 = scmp.lt.s32.totalorder %s27, 0
        %s243 = scalar_select %p242, %s27, 0
        %s244 = scalar_lea.vmem %s2, %s243
        %p245 = pneg %p117
        %p246 = pneg %p114
        %p247 = pneg %p145
        %p248 = pneg %p142
        %s249 = sand.u32 %s132, 1
        %s250 = scalar_lea.sflag [#allocation5], %s249
        %s251 = sand.u32 %s132, 1
        %s252 = smul.addr %s251, 256
        %s253 = scalar_lea.vmem [#allocation8], %s252
        %s254 = smul.u32 64, %s26
        %s255 = smul.u32 16, %s28
        %p256 = scmp.lt.s32.totalorder %s27, 0
        %s257 = scalar_select %p256, %s27, 0
        %s258 = scalar_lea.vmem %s2, %s257
        %s259 = smul.u32 64, %s26
        %p260 = scmp.eq.s32.totalorder %s28, 0
        // Predicated region
        $region41: #{tpu_custom_call.1} parent=31 // pred_check
          %p261 = pneg %p260
        $region42: #{tpu_custom_call.1} parent=31 // pred_check_branch
          %263 = sbr.rel (%p261) target = $region44
        $region43: #{tpu_custom_call.1} parent=31 // pred_region
          %264 = vst [vmem:[#allocation2] sm:$0xff] 0.0
          %265 = vst [vmem:[#allocation2 + $0x8] sm:$0xff] 0.0
          %266 = vst [vmem:[#allocation2 + $0x10] sm:$0xff] 0.0
          %267 = vst [vmem:[#allocation2 + $0x18] sm:$0xff] 0.0
          %268 = vst [vmem:[#allocation2 + $0x20] sm:$0xff] 0.0
          %269 = vst [vmem:[#allocation2 + $0x28] sm:$0xff] 0.0
          %270 = vst [vmem:[#allocation2 + $0x30] sm:$0xff] 0.0
          %271 = vst [vmem:[#allocation2 + $0x38] sm:$0xff] 0.0
          %272 = vst [vmem:[#allocation2 + $0x40] sm:$0xff] 0.0
          %273 = vst [vmem:[#allocation2 + $0x48] sm:$0xff] 0.0
          %274 = vst [vmem:[#allocation2 + $0x50] sm:$0xff] 0.0
          %275 = vst [vmem:[#allocation2 + $0x58] sm:$0xff] 0.0
          %276 = vst [vmem:[#allocation2 + $0x60] sm:$0xff] 0.0
          %277 = vst [vmem:[#allocation2 + $0x68] sm:$0xff] 0.0
          %278 = vst [vmem:[#allocation2 + $0x70] sm:$0xff] 0.0
          %279 = vst [vmem:[#allocation2 + $0x78] sm:$0xff] 0.0
          %280 = vst [vmem:[#allocation2 + $0x80] sm:$0xff] 0.0
          %281 = vst [vmem:[#allocation2 + $0x88] sm:$0xff] 0.0
          %282 = vst [vmem:[#allocation2 + $0x90] sm:$0xff] 0.0
          %283 = vst [vmem:[#allocation2 + $0x98] sm:$0xff] 0.0
          %284 = vst [vmem:[#allocation2 + $0xa0] sm:$0xff] 0.0
          %285 = vst [vmem:[#allocation2 + $0xa8] sm:$0xff] 0.0
          %286 = vst [vmem:[#allocation2 + $0xb0] sm:$0xff] 0.0
          %287 = vst [vmem:[#allocation2 + $0xb8] sm:$0xff] 0.0
          %288 = vst [vmem:[#allocation2 + $0xc0] sm:$0xff] 0.0
          %289 = vst [vmem:[#allocation2 + $0xc8] sm:$0xff] 0.0
          %290 = vst [vmem:[#allocation2 + $0xd0] sm:$0xff] 0.0
          %291 = vst [vmem:[#allocation2 + $0xd8] sm:$0xff] 0.0
          %292 = vst [vmem:[#allocation2 + $0xe0] sm:$0xff] 0.0
          %293 = vst [vmem:[#allocation2 + $0xe8] sm:$0xff] 0.0
          %294 = vst [vmem:[#allocation2 + $0xf0] sm:$0xff] 0.0
          %295 = vst [vmem:[#allocation2 + $0xf8] sm:$0xff] 0.0
          %296 = vst [vmem:[#allocation2 + $0x100] sm:$0xff] 0.0
          %297 = vst [vmem:[#allocation2 + $0x108] sm:$0xff] 0.0
          %298 = vst [vmem:[#allocation2 + $0x110] sm:$0xff] 0.0
          %299 = vst [vmem:[#allocation2 + $0x118] sm:$0xff] 0.0
          %300 = vst [vmem:[#allocation2 + $0x120] sm:$0xff] 0.0
          %301 = vst [vmem:[#allocation2 + $0x128] sm:$0xff] 0.0
          %302 = vst [vmem:[#allocation2 + $0x130] sm:$0xff] 0.0
          %303 = vst [vmem:[#allocation2 + $0x138] sm:$0xff] 0.0
          %304 = vst [vmem:[#allocation2 + $0x140] sm:$0xff] 0.0
          %305 = vst [vmem:[#allocation2 + $0x148] sm:$0xff] 0.0
          %306 = vst [vmem:[#allocation2 + $0x150] sm:$0xff] 0.0
          %307 = vst [vmem:[#allocation2 + $0x158] sm:$0xff] 0.0
          %308 = vst [vmem:[#allocation2 + $0x160] sm:$0xff] 0.0
          %309 = vst [vmem:[#allocation2 + $0x168] sm:$0xff] 0.0
          %310 = vst [vmem:[#allocation2 + $0x170] sm:$0xff] 0.0
          %311 = vst [vmem:[#allocation2 + $0x178] sm:$0xff] 0.0
          %312 = vst [vmem:[#allocation2 + $0x180] sm:$0xff] 0.0
          %313 = vst [vmem:[#allocation2 + $0x188] sm:$0xff] 0.0
          %314 = vst [vmem:[#allocation2 + $0x190] sm:$0xff] 0.0
          %315 = vst [vmem:[#allocation2 + $0x198] sm:$0xff] 0.0
          %316 = vst [vmem:[#allocation2 + $0x1a0] sm:$0xff] 0.0
          %317 = vst [vmem:[#allocation2 + $0x1a8] sm:$0xff] 0.0
          %318 = vst [vmem:[#allocation2 + $0x1b0] sm:$0xff] 0.0
          %319 = vst [vmem:[#allocation2 + $0x1b8] sm:$0xff] 0.0
          %320 = vst [vmem:[#allocation2 + $0x1c0] sm:$0xff] 0.0
          %321 = vst [vmem:[#allocation2 + $0x1c8] sm:$0xff] 0.0
          %322 = vst [vmem:[#allocation2 + $0x1d0] sm:$0xff] 0.0
          %323 = vst [vmem:[#allocation2 + $0x1d8] sm:$0xff] 0.0
          %324 = vst [vmem:[#allocation2 + $0x1e0] sm:$0xff] 0.0
          %325 = vst [vmem:[#allocation2 + $0x1e8] sm:$0xff] 0.0
          %326 = vst [vmem:[#allocation2 + $0x1f0] sm:$0xff] 0.0
          %327 = vst [vmem:[#allocation2 + $0x1f8] sm:$0xff] 0.0
        $region44: #{tpu_custom_call.1} parent=31 // pred_fallthru
          _
        %v328 = vld [vmem:[#allocation2] sm:$0xff]
        %v329 = vld [vmem:[#allocation2 + $0x8] sm:$0xff]
        %v330 = vld [vmem:[#allocation2 + $0x10] sm:$0xff]
        %v331 = vld [vmem:[#allocation2 + $0x18] sm:$0xff]
        %v332 = vld [vmem:[#allocation2 + $0x20] sm:$0xff]
        %v333 = vld [vmem:[#allocation2 + $0x28] sm:$0xff]
        %v334 = vld [vmem:[#allocation2 + $0x30] sm:$0xff]
        %v335 = vld [vmem:[#allocation2 + $0x38] sm:$0xff]
        %v336 = vld [vmem:[#allocation2 + $0x40] sm:$0xff]
        %v337 = vld [vmem:[#allocation2 + $0x48] sm:$0xff]
        %v338 = vld [vmem:[#allocation2 + $0x50] sm:$0xff]
        %v339 = vld [vmem:[#allocation2 + $0x58] sm:$0xff]
        %v340 = vld [vmem:[#allocation2 + $0x60] sm:$0xff]
        %v341 = vld [vmem:[#allocation2 + $0x68] sm:$0xff]
        %v342 = vld [vmem:[#allocation2 + $0x70] sm:$0xff]
        %v343 = vld [vmem:[#allocation2 + $0x78] sm:$0xff]
        %v344 = vld [vmem:[#allocation2 + $0x80] sm:$0xff]
        %v345 = vld [vmem:[#allocation2 + $0x88] sm:$0xff]
        %v346 = vld [vmem:[#allocation2 + $0x90] sm:$0xff]
        %v347 = vld [vmem:[#allocation2 + $0x98] sm:$0xff]
        %v348 = vld [vmem:[#allocation2 + $0xa0] sm:$0xff]
        %v349 = vld [vmem:[#allocation2 + $0xa8] sm:$0xff]
        %v350 = vld [vmem:[#allocation2 + $0xb0] sm:$0xff]
        %v351 = vld [vmem:[#allocation2 + $0xb8] sm:$0xff]
        %v352 = vld [vmem:[#allocation2 + $0xc0] sm:$0xff]
        %v353 = vld [vmem:[#allocation2 + $0xc8] sm:$0xff]
        %v354 = vld [vmem:[#allocation2 + $0xd0] sm:$0xff]
        %v355 = vld [vmem:[#allocation2 + $0xd8] sm:$0xff]
        %v356 = vld [vmem:[#allocation2 + $0xe0] sm:$0xff]
        %v357 = vld [vmem:[#allocation2 + $0xe8] sm:$0xff]
        %v358 = vld [vmem:[#allocation2 + $0xf0] sm:$0xff]
        %v359 = vld [vmem:[#allocation2 + $0xf8] sm:$0xff]
        %v360 = vld [vmem:[#allocation2 + $0x100] sm:$0xff]
        %v361 = vld [vmem:[#allocation2 + $0x108] sm:$0xff]
        %v362 = vld [vmem:[#allocation2 + $0x110] sm:$0xff]
        %v363 = vld [vmem:[#allocation2 + $0x118] sm:$0xff]
        %v364 = vld [vmem:[#allocation2 + $0x120] sm:$0xff]
        %v365 = vld [vmem:[#allocation2 + $0x128] sm:$0xff]
        %v366 = vld [vmem:[#allocation2 + $0x130] sm:$0xff]
        %v367 = vld [vmem:[#allocation2 + $0x138] sm:$0xff]
        %v368 = vld [vmem:[#allocation2 + $0x140] sm:$0xff]
        %v369 = vld [vmem:[#allocation2 + $0x148] sm:$0xff]
        %v370 = vld [vmem:[#allocation2 + $0x150] sm:$0xff]
        %v371 = vld [vmem:[#allocation2 + $0x158] sm:$0xff]
        %v372 = vld [vmem:[#allocation2 + $0x160] sm:$0xff]
        %v373 = vld [vmem:[#allocation2 + $0x168] sm:$0xff]
        %v374 = vld [vmem:[#allocation2 + $0x170] sm:$0xff]
        %v375 = vld [vmem:[#allocation2 + $0x178] sm:$0xff]
        %v376 = vld [vmem:[#allocation2 + $0x180] sm:$0xff]
        %v377 = vld [vmem:[#allocation2 + $0x188] sm:$0xff]
        %v378 = vld [vmem:[#allocation2 + $0x190] sm:$0xff]
        %v379 = vld [vmem:[#allocation2 + $0x198] sm:$0xff]
        %v380 = vld [vmem:[#allocation2 + $0x1a0] sm:$0xff]
        %v381 = vld [vmem:[#allocation2 + $0x1a8] sm:$0xff]
        %v382 = vld [vmem:[#allocation2 + $0x1b0] sm:$0xff]
        %v383 = vld [vmem:[#allocation2 + $0x1b8] sm:$0xff]
        %v384 = vld [vmem:[#allocation2 + $0x1c0] sm:$0xff]
        %v385 = vld [vmem:[#allocation2 + $0x1c8] sm:$0xff]
        %v386 = vld [vmem:[#allocation2 + $0x1d0] sm:$0xff]
        %v387 = vld [vmem:[#allocation2 + $0x1d8] sm:$0xff]
        %v388 = vld [vmem:[#allocation2 + $0x1e0] sm:$0xff]
        %v389 = vld [vmem:[#allocation2 + $0x1e8] sm:$0xff]
        %v390 = vld [vmem:[#allocation2 + $0x1f0] sm:$0xff]
        %v391 = vld [vmem:[#allocation2 + $0x1f8] sm:$0xff]
        %v392 = vld [vmem:[%s222] sm:$0xf]
        %v393 = vld [vmem:[%s222 + $0x4] sm:$0xf]
        %v394 = vld [vmem:[%s222 + $0x8] sm:$0xf]
        %v395 = vld [vmem:[%s222 + $0xc] sm:$0xf]
        %v396 = vld [vmem:[%s222 + $0x10] sm:$0xf]
        %v397 = vld [vmem:[%s222 + $0x14] sm:$0xf]
        %v398 = vld [vmem:[%s222 + $0x18] sm:$0xf]
        %v399 = vld [vmem:[%s222 + $0x1c] sm:$0xf]
        %v400 = vld [vmem:[%s222 + $0x20] sm:$0xf]
        %v401 = vld [vmem:[%s222 + $0x24] sm:$0xf]
        %v402 = vld [vmem:[%s222 + $0x28] sm:$0xf]
        %v403 = vld [vmem:[%s222 + $0x2c] sm:$0xf]
        %v404 = vld [vmem:[%s222 + $0x30] sm:$0xf]
        %v405 = vld [vmem:[%s222 + $0x34] sm:$0xf]
        %v406 = vld [vmem:[%s222 + $0x38] sm:$0xf]
        %v407 = vld [vmem:[%s222 + $0x3c] sm:$0xf]
        %v408 = vld [vmem:[%s222 + $0x40] sm:$0xf]
        %v409 = vld [vmem:[%s222 + $0x44] sm:$0xf]
        %v410 = vld [vmem:[%s222 + $0x48] sm:$0xf]
        %v411 = vld [vmem:[%s222 + $0x4c] sm:$0xf]
        %v412 = vld [vmem:[%s222 + $0x50] sm:$0xf]
        %v413 = vld [vmem:[%s222 + $0x54] sm:$0xf]
        %v414 = vld [vmem:[%s222 + $0x58] sm:$0xf]
        %v415 = vld [vmem:[%s222 + $0x5c] sm:$0xf]
        %v416 = vld [vmem:[%s222 + $0x60] sm:$0xf]
        %v417 = vld [vmem:[%s222 + $0x64] sm:$0xf]
        %v418 = vld [vmem:[%s222 + $0x68] sm:$0xf]
        %v419 = vld [vmem:[%s222 + $0x6c] sm:$0xf]
        %v420 = vld [vmem:[%s222 + $0x70] sm:$0xf]
        %v421 = vld [vmem:[%s222 + $0x74] sm:$0xf]
        %v422 = vld [vmem:[%s222 + $0x78] sm:$0xf]
        %v423 = vld [vmem:[%s222 + $0x7c] sm:$0xf]
        %v424 = vld [vmem:[%s222 + $0x80] sm:$0xf]
        %v425 = vld [vmem:[%s222 + $0x84] sm:$0xf]
        %v426 = vld [vmem:[%s222 + $0x88] sm:$0xf]
        %v427 = vld [vmem:[%s222 + $0x8c] sm:$0xf]
        %v428 = vld [vmem:[%s222 + $0x90] sm:$0xf]
        %v429 = vld [vmem:[%s222 + $0x94] sm:$0xf]
        %v430 = vld [vmem:[%s222 + $0x98] sm:$0xf]
        %v431 = vld [vmem:[%s222 + $0x9c] sm:$0xf]
        %v432 = vld [vmem:[%s222 + $0xa0] sm:$0xf]
        %v433 = vld [vmem:[%s222 + $0xa4] sm:$0xf]
        %v434 = vld [vmem:[%s222 + $0xa8] sm:$0xf]
        %v435 = vld [vmem:[%s222 + $0xac] sm:$0xf]
        %v436 = vld [vmem:[%s222 + $0xb0] sm:$0xf]
        %v437 = vld [vmem:[%s222 + $0xb4] sm:$0xf]
        %v438 = vld [vmem:[%s222 + $0xb8] sm:$0xf]
        %v439 = vld [vmem:[%s222 + $0xbc] sm:$0xf]
        %v440 = vld [vmem:[%s222 + $0xc0] sm:$0xf]
        %v441 = vld [vmem:[%s222 + $0xc4] sm:$0xf]
        %v442 = vld [vmem:[%s222 + $0xc8] sm:$0xf]
        %v443 = vld [vmem:[%s222 + $0xcc] sm:$0xf]
        %v444 = vld [vmem:[%s222 + $0xd0] sm:$0xf]
        %v445 = vld [vmem:[%s222 + $0xd4] sm:$0xf]
        %v446 = vld [vmem:[%s222 + $0xd8] sm:$0xf]
        %v447 = vld [vmem:[%s222 + $0xdc] sm:$0xf]
        %v448 = vld [vmem:[%s222 + $0xe0] sm:$0xf]
        %v449 = vld [vmem:[%s222 + $0xe4] sm:$0xf]
        %v450 = vld [vmem:[%s222 + $0xe8] sm:$0xf]
        %v451 = vld [vmem:[%s222 + $0xec] sm:$0xf]
        %v452 = vld [vmem:[%s222 + $0xf0] sm:$0xf]
        %v453 = vld [vmem:[%s222 + $0xf4] sm:$0xf]
        %v454 = vld [vmem:[%s222 + $0xf8] sm:$0xf]
        %v455 = vld [vmem:[%s222 + $0xfc] sm:$0xf]
        %v456 = vld [vmem:[#allocation6] sm:$0xf]
        %v457 = vld [vmem:[#allocation6 + $0x4] sm:$0xf]
        %v458 = vld [vmem:[#allocation6 + $0x8] sm:$0xf]
        %v459 = vld [vmem:[#allocation6 + $0xc] sm:$0xf]
        %v460 = vld [vmem:[#allocation6 + $0x10] sm:$0xf]
        %v461 = vld [vmem:[#allocation6 + $0x14] sm:$0xf]
        %v462 = vld [vmem:[#allocation6 + $0x18] sm:$0xf]
        %v463 = vld [vmem:[#allocation6 + $0x1c] sm:$0xf]
        %v464 = vld [vmem:[#allocation6 + $0x20] sm:$0xf]
        %v465 = vld [vmem:[#allocation6 + $0x24] sm:$0xf]
        %v466 = vld [vmem:[#allocation6 + $0x28] sm:$0xf]
        %v467 = vld [vmem:[#allocation6 + $0x2c] sm:$0xf]
        %v468 = vld [vmem:[#allocation6 + $0x30] sm:$0xf]
        %v469 = vld [vmem:[#allocation6 + $0x34] sm:$0xf]
        %v470 = vld [vmem:[#allocation6 + $0x38] sm:$0xf]
        %v471 = vld [vmem:[#allocation6 + $0x3c] sm:$0xf]
        %v536 = vunpack.c.l.b16 %v392
        %v537 = vunpack.c.l.b16 %v393
        %v538 = vunpack.c.l.b16 %v394
        %v539 = vunpack.c.l.b16 %v395
        %v540 = vunpack.c.l.b16 %v396
        %v541 = vunpack.c.l.b16 %v397
        %v542 = vunpack.c.l.b16 %v398
        %v543 = vunpack.c.l.b16 %v399
        %v544 = vunpack.c.l.b16 %v400
        %v545 = vunpack.c.l.b16 %v401
        %v546 = vunpack.c.l.b16 %v402
        %v547 = vunpack.c.l.b16 %v403
        %v548 = vunpack.c.l.b16 %v404
        %v549 = vunpack.c.l.b16 %v405
        %v550 = vunpack.c.l.b16 %v406
        %v551 = vunpack.c.l.b16 %v407
        %v552 = vunpack.c.l.b16 %v408
        %v553 = vunpack.c.l.b16 %v409
        %v554 = vunpack.c.l.b16 %v410
        %v555 = vunpack.c.l.b16 %v411
        %v556 = vunpack.c.l.b16 %v412
        %v557 = vunpack.c.l.b16 %v413
        %v558 = vunpack.c.l.b16 %v414
        %v559 = vunpack.c.l.b16 %v415
        %v560 = vunpack.c.l.b16 %v416
        %v561 = vunpack.c.l.b16 %v417
        %v562 = vunpack.c.l.b16 %v418
        %v563 = vunpack.c.l.b16 %v419
        %v564 = vunpack.c.l.b16 %v420
        %v565 = vunpack.c.l.b16 %v421
        %v566 = vunpack.c.l.b16 %v422
        %v567 = vunpack.c.l.b16 %v423
        %v568 = vunpack.c.l.b16 %v424
        %v569 = vunpack.c.l.b16 %v425
        %v570 = vunpack.c.l.b16 %v426
        %v571 = vunpack.c.l.b16 %v427
        %v572 = vunpack.c.l.b16 %v428
        %v573 = vunpack.c.l.b16 %v429
        %v574 = vunpack.c.l.b16 %v430
        %v575 = vunpack.c.l.b16 %v431
        %v576 = vunpack.c.l.b16 %v432
        %v577 = vunpack.c.l.b16 %v433
        %v578 = vunpack.c.l.b16 %v434
        %v579 = vunpack.c.l.b16 %v435
        %v580 = vunpack.c.l.b16 %v436
        %v581 = vunpack.c.l.b16 %v437
        %v582 = vunpack.c.l.b16 %v438
        %v583 = vunpack.c.l.b16 %v439
        %v584 = vunpack.c.l.b16 %v440
        %v585 = vunpack.c.l.b16 %v441
        %v586 = vunpack.c.l.b16 %v442
        %v587 = vunpack.c.l.b16 %v443
        %v588 = vunpack.c.l.b16 %v444
        %v589 = vunpack.c.l.b16 %v445
        %v590 = vunpack.c.l.b16 %v446
        %v591 = vunpack.c.l.b16 %v447
        %v592 = vunpack.c.l.b16 %v448
        %v593 = vunpack.c.l.b16 %v449
        %v594 = vunpack.c.l.b16 %v450
        %v595 = vunpack.c.l.b16 %v451
        %v596 = vunpack.c.l.b16 %v452
        %v597 = vunpack.c.l.b16 %v453
        %v598 = vunpack.c.l.b16 %v454
        %v599 = vunpack.c.l.b16 %v455
        %v600 = vpack.c.b16 %v537, %v536
        %v601 = vpack.c.b16 %v539, %v538
        %v602 = vpack.c.b16 %v541, %v540
        %v603 = vpack.c.b16 %v543, %v542
        %v604 = vpack.c.b16 %v545, %v544
        %v605 = vpack.c.b16 %v547, %v546
        %v606 = vpack.c.b16 %v549, %v548
        %v607 = vpack.c.b16 %v551, %v550
        %v608 = vpack.c.b16 %v553, %v552
        %v609 = vpack.c.b16 %v555, %v554
        %v610 = vpack.c.b16 %v557, %v556
        %v611 = vpack.c.b16 %v559, %v558
        %v612 = vpack.c.b16 %v561, %v560
        %v613 = vpack.c.b16 %v563, %v562
        %v614 = vpack.c.b16 %v565, %v564
        %v615 = vpack.c.b16 %v567, %v566
        %v616 = vpack.c.b16 %v569, %v568
        %v617 = vpack.c.b16 %v571, %v570
        %v618 = vpack.c.b16 %v573, %v572
        %v619 = vpack.c.b16 %v575, %v574
        %v620 = vpack.c.b16 %v577, %v576
        %v621 = vpack.c.b16 %v579, %v578
        %v622 = vpack.c.b16 %v581, %v580
        %v623 = vpack.c.b16 %v583, %v582
        %v624 = vpack.c.b16 %v585, %v584
        %v625 = vpack.c.b16 %v587, %v586
        %v626 = vpack.c.b16 %v589, %v588
        %v627 = vpack.c.b16 %v591, %v590
        %v628 = vpack.c.b16 %v593, %v592
        %v629 = vpack.c.b16 %v595, %v594
        %v630 = vpack.c.b16 %v597, %v596
        %v631 = vpack.c.b16 %v599, %v598
        %v680 = vunpack.c.l.b16 %v456
        %v681 = vunpack.c.l.b16 %v457
        %v682 = vunpack.c.l.b16 %v458
        %v683 = vunpack.c.l.b16 %v459
        %v684 = vunpack.c.l.b16 %v460
        %v685 = vunpack.c.l.b16 %v461
        %v686 = vunpack.c.l.b16 %v462
        %v687 = vunpack.c.l.b16 %v463
        %v688 = vunpack.c.l.b16 %v464
        %v689 = vunpack.c.l.b16 %v465
        %v690 = vunpack.c.l.b16 %v466
        %v691 = vunpack.c.l.b16 %v467
        %v692 = vunpack.c.l.b16 %v468
        %v693 = vunpack.c.l.b16 %v469
        %v694 = vunpack.c.l.b16 %v470
        %v695 = vunpack.c.l.b16 %v471
        %v696 = vpack.c.b16 %v681, %v680
        %v697 = vpack.c.b16 %v683, %v682
        %v698 = vpack.c.b16 %v685, %v684
        %v699 = vpack.c.b16 %v687, %v686
        %v700 = vpack.c.b16 %v689, %v688
        %v701 = vpack.c.b16 %v691, %v690
        %v702 = vpack.c.b16 %v693, %v692
        %v703 = vpack.c.b16 %v695, %v694
        %712 = vmatpush.bf16.msra.mxu0 %v703
        %713 = vmatpush.bf16.msra.mxu0 %v702
        %714 = vmatpush.bf16.msra.mxu0 %v701
        %715 = vmatpush.bf16.msra.mxu0 %v700
        %716 = vmatpush.bf16.msra.mxu0 %v699
        %717 = vmatpush.bf16.msra.mxu0 %v698
        %718 = vmatpush.bf16.msra.mxu0 %v697
        %719 = vmatpush.bf16.msra.mxu0 %v696
        %720 = vmatmul.bf16.gmra.mxu0 %v600
        %v721 = vpop.f32.mrf.mxu0
        %v722 = vadd.f32 0.0, %v721
        %v723 = vpop.f32.mrf.mxu0
        %v724 = vadd.f32 0.0, %v723
        %725 = vmatmul.bf16.gmra.mxu0 %v601
        %v726 = vpop.f32.mrf.mxu0
        %v727 = vadd.f32 0.0, %v726
        %v728 = vpop.f32.mrf.mxu0
        %v729 = vadd.f32 0.0, %v728
        %730 = vmatmul.bf16.gmra.mxu0 %v602
        %v731 = vpop.f32.mrf.mxu0
        %v732 = vadd.f32 0.0, %v731
        %v733 = vpop.f32.mrf.mxu0
        %v734 = vadd.f32 0.0, %v733
        %735 = vmatmul.bf16.gmra.mxu0 %v603
        %v736 = vpop.f32.mrf.mxu0
        %v737 = vadd.f32 0.0, %v736
        %v738 = vpop.f32.mrf.mxu0
        %v739 = vadd.f32 0.0, %v738
        %740 = vmatmul.bf16.gmra.mxu0 %v604
        %v741 = vpop.f32.mrf.mxu0
        %v742 = vadd.f32 0.0, %v741
        %v743 = vpop.f32.mrf.mxu0
        %v744 = vadd.f32 0.0, %v743
        %745 = vmatmul.bf16.gmra.mxu0 %v605
        %v746 = vpop.f32.mrf.mxu0
        %v747 = vadd.f32 0.0, %v746
        %v748 = vpop.f32.mrf.mxu0
        %v749 = vadd.f32 0.0, %v748
        %750 = vmatmul.bf16.gmra.mxu0 %v606
        %v751 = vpop.f32.mrf.mxu0
        %v752 = vadd.f32 0.0, %v751
        %v753 = vpop.f32.mrf.mxu0
        %v754 = vadd.f32 0.0, %v753
        %755 = vmatmul.bf16.gmra.mxu0 %v607
        %v756 = vpop.f32.mrf.mxu0
        %v757 = vadd.f32 0.0, %v756
        %v758 = vpop.f32.mrf.mxu0
        %v759 = vadd.f32 0.0, %v758
        %760 = vmatmul.bf16.gmra.mxu0 %v608
        %v761 = vpop.f32.mrf.mxu0
        %v762 = vadd.f32 0.0, %v761
        %v763 = vpop.f32.mrf.mxu0
        %v764 = vadd.f32 0.0, %v763
        %765 = vmatmul.bf16.gmra.mxu0 %v609
        %v766 = vpop.f32.mrf.mxu0
        %v767 = vadd.f32 0.0, %v766
        %v768 = vpop.f32.mrf.mxu0
        %v769 = vadd.f32 0.0, %v768
        %770 = vmatmul.bf16.gmra.mxu0 %v610
        %v771 = vpop.f32.mrf.mxu0
        %v772 = vadd.f32 0.0, %v771
        %v773 = vpop.f32.mrf.mxu0
        %v774 = vadd.f32 0.0, %v773
        %775 = vmatmul.bf16.gmra.mxu0 %v611
        %v776 = vpop.f32.mrf.mxu0
        %v777 = vadd.f32 0.0, %v776
        %v778 = vpop.f32.mrf.mxu0
        %v779 = vadd.f32 0.0, %v778
        %780 = vmatmul.bf16.gmra.mxu0 %v612
        %v781 = vpop.f32.mrf.mxu0
        %v782 = vadd.f32 0.0, %v781
        %v783 = vpop.f32.mrf.mxu0
        %v784 = vadd.f32 0.0, %v783
        %785 = vmatmul.bf16.gmra.mxu0 %v613
        %v786 = vpop.f32.mrf.mxu0
        %v787 = vadd.f32 0.0, %v786
        %v788 = vpop.f32.mrf.mxu0
        %v789 = vadd.f32 0.0, %v788
        %790 = vmatmul.bf16.gmra.mxu0 %v614
        %v791 = vpop.f32.mrf.mxu0
        %v792 = vadd.f32 0.0, %v791
        %v793 = vpop.f32.mrf.mxu0
        %v794 = vadd.f32 0.0, %v793
        %795 = vmatmul.bf16.gmra.mxu0 %v615
        %v796 = vpop.f32.mrf.mxu0
        %v797 = vadd.f32 0.0, %v796
        %v798 = vpop.f32.mrf.mxu0
        %v799 = vadd.f32 0.0, %v798
        %800 = vmatmul.bf16.gmra.mxu0 %v616
        %v801 = vpop.f32.mrf.mxu0
        %v802 = vadd.f32 0.0, %v801
        %v803 = vpop.f32.mrf.mxu0
        %v804 = vadd.f32 0.0, %v803
        %805 = vmatmul.bf16.gmra.mxu0 %v617
        %v806 = vpop.f32.mrf.mxu0
        %v807 = vadd.f32 0.0, %v806
        %v808 = vpop.f32.mrf.mxu0
        %v809 = vadd.f32 0.0, %v808
        %810 = vmatmul.bf16.gmra.mxu0 %v618
        %v811 = vpop.f32.mrf.mxu0
        %v812 = vadd.f32 0.0, %v811
        %v813 = vpop.f32.mrf.mxu0
        %v814 = vadd.f32 0.0, %v813
        %815 = vmatmul.bf16.gmra.mxu0 %v619
        %v816 = vpop.f32.mrf.mxu0
        %v817 = vadd.f32 0.0, %v816
        %v818 = vpop.f32.mrf.mxu0
        %v819 = vadd.f32 0.0, %v818
        %820 = vmatmul.bf16.gmra.mxu0 %v620
        %v821 = vpop.f32.mrf.mxu0
        %v822 = vadd.f32 0.0, %v821
        %v823 = vpop.f32.mrf.mxu0
        %v824 = vadd.f32 0.0, %v823
        %825 = vmatmul.bf16.gmra.mxu0 %v621
        %v826 = vpop.f32.mrf.mxu0
        %v827 = vadd.f32 0.0, %v826
        %v828 = vpop.f32.mrf.mxu0
        %v829 = vadd.f32 0.0, %v828
        %830 = vmatmul.bf16.gmra.mxu0 %v622
        %v831 = vpop.f32.mrf.mxu0
        %v832 = vadd.f32 0.0, %v831
        %v833 = vpop.f32.mrf.mxu0
        %v834 = vadd.f32 0.0, %v833
        %835 = vmatmul.bf16.gmra.mxu0 %v623
        %v836 = vpop.f32.mrf.mxu0
        %v837 = vadd.f32 0.0, %v836
        %v838 = vpop.f32.mrf.mxu0
        %v839 = vadd.f32 0.0, %v838
        %840 = vmatmul.bf16.gmra.mxu0 %v624
        %v841 = vpop.f32.mrf.mxu0
        %v842 = vadd.f32 0.0, %v841
        %v843 = vpop.f32.mrf.mxu0
        %v844 = vadd.f32 0.0, %v843
        %845 = vmatmul.bf16.gmra.mxu0 %v625
        %v846 = vpop.f32.mrf.mxu0
        %v847 = vadd.f32 0.0, %v846
        %v848 = vpop.f32.mrf.mxu0
        %v849 = vadd.f32 0.0, %v848
        %850 = vmatmul.bf16.gmra.mxu0 %v626
        %v851 = vpop.f32.mrf.mxu0
        %v852 = vadd.f32 0.0, %v851
        %v853 = vpop.f32.mrf.mxu0
        %v854 = vadd.f32 0.0, %v853
        %855 = vmatmul.bf16.gmra.mxu0 %v627
        %v856 = vpop.f32.mrf.mxu0
        %v857 = vadd.f32 0.0, %v856
        %v858 = vpop.f32.mrf.mxu0
        %v859 = vadd.f32 0.0, %v858
        %860 = vmatmul.bf16.gmra.mxu0 %v628
        %v861 = vpop.f32.mrf.mxu0
        %v862 = vadd.f32 0.0, %v861
        %v863 = vpop.f32.mrf.mxu0
        %v864 = vadd.f32 0.0, %v863
        %865 = vmatmul.bf16.gmra.mxu0 %v629
        %v866 = vpop.f32.mrf.mxu0
        %v867 = vadd.f32 0.0, %v866
        %v868 = vpop.f32.mrf.mxu0
        %v869 = vadd.f32 0.0, %v868
        %870 = vmatmul.bf16.gmra.mxu0 %v630
        %v871 = vpop.f32.mrf.mxu0
        %v872 = vadd.f32 0.0, %v871
        %v873 = vpop.f32.mrf.mxu0
        %v874 = vadd.f32 0.0, %v873
        %875 = vmatmul.bf16.gmra.mxu0 %v631
        %v876 = vpop.f32.mrf.mxu0
        %v877 = vadd.f32 0.0, %v876
        %v878 = vpop.f32.mrf.mxu0
        %v879 = vadd.f32 0.0, %v878
        %880 = vdwg.mxu0
        %v881 = vadd.f32 %v328, %v722
        %v882 = vadd.f32 %v329, %v724
        %v883 = vadd.f32 %v330, %v727
        %v884 = vadd.f32 %v331, %v729
        %v885 = vadd.f32 %v332, %v732
        %v886 = vadd.f32 %v333, %v734
        %v887 = vadd.f32 %v334, %v737
        %v888 = vadd.f32 %v335, %v739
        %v889 = vadd.f32 %v336, %v742
        %v890 = vadd.f32 %v337, %v744
        %v891 = vadd.f32 %v338, %v747
        %v892 = vadd.f32 %v339, %v749
        %v893 = vadd.f32 %v340, %v752
        %v894 = vadd.f32 %v341, %v754
        %v895 = vadd.f32 %v342, %v757
        %v896 = vadd.f32 %v343, %v759
        %v897 = vadd.f32 %v344, %v762
        %v898 = vadd.f32 %v345, %v764
        %v899 = vadd.f32 %v346, %v767
        %v900 = vadd.f32 %v347, %v769
        %v901 = vadd.f32 %v348, %v772
        %v902 = vadd.f32 %v349, %v774
        %v903 = vadd.f32 %v350, %v777
        %v904 = vadd.f32 %v351, %v779
        %v905 = vadd.f32 %v352, %v782
        %v906 = vadd.f32 %v353, %v784
        %v907 = vadd.f32 %v354, %v787
        %v908 = vadd.f32 %v355, %v789
        %v909 = vadd.f32 %v356, %v792
        %v910 = vadd.f32 %v357, %v794
        %v911 = vadd.f32 %v358, %v797
        %v912 = vadd.f32 %v359, %v799
        %v913 = vadd.f32 %v360, %v802
        %v914 = vadd.f32 %v361, %v804
        %v915 = vadd.f32 %v362, %v807
        %v916 = vadd.f32 %v363, %v809
        %v917 = vadd.f32 %v364, %v812
        %v918 = vadd.f32 %v365, %v814
        %v919 = vadd.f32 %v366, %v817
        %v920 = vadd.f32 %v367, %v819
        %v921 = vadd.f32 %v368, %v822
        %v922 = vadd.f32 %v369, %v824
        %v923 = vadd.f32 %v370, %v827
        %v924 = vadd.f32 %v371, %v829
        %v925 = vadd.f32 %v372, %v832
        %v926 = vadd.f32 %v373, %v834
        %v927 = vadd.f32 %v374, %v837
        %v928 = vadd.f32 %v375, %v839
        %v929 = vadd.f32 %v376, %v842
        %v930 = vadd.f32 %v377, %v844
        %v931 = vadd.f32 %v378, %v847
        %v932 = vadd.f32 %v379, %v849
        %v933 = vadd.f32 %v380, %v852
        %v934 = vadd.f32 %v381, %v854
        %v935 = vadd.f32 %v382, %v857
        %v936 = vadd.f32 %v383, %v859
        %v937 = vadd.f32 %v384, %v862
        %v938 = vadd.f32 %v385, %v864
        %v939 = vadd.f32 %v386, %v867
        %v940 = vadd.f32 %v387, %v869
        %v941 = vadd.f32 %v388, %v872
        %v942 = vadd.f32 %v389, %v874
        %v943 = vadd.f32 %v390, %v877
        %v944 = vadd.f32 %v391, %v879
        %945 = vst [vmem:[#allocation2] sm:$0xff] %v881
        %946 = vst [vmem:[#allocation2 + $0x8] sm:$0xff] %v882
        %947 = vst [vmem:[#allocation2 + $0x10] sm:$0xff] %v883
        %948 = vst [vmem:[#allocation2 + $0x18] sm:$0xff] %v884
        %949 = vst [vmem:[#allocation2 + $0x20] sm:$0xff] %v885
        %950 = vst [vmem:[#allocation2 + $0x28] sm:$0xff] %v886
        %951 = vst [vmem:[#allocation2 + $0x30] sm:$0xff] %v887
        %952 = vst [vmem:[#allocation2 + $0x38] sm:$0xff] %v888
        %953 = vst [vmem:[#allocation2 + $0x40] sm:$0xff] %v889
        %954 = vst [vmem:[#allocation2 + $0x48] sm:$0xff] %v890
        %955 = vst [vmem:[#allocation2 + $0x50] sm:$0xff] %v891
        %956 = vst [vmem:[#allocation2 + $0x58] sm:$0xff] %v892
        %957 = vst [vmem:[#allocation2 + $0x60] sm:$0xff] %v893
        %958 = vst [vmem:[#allocation2 + $0x68] sm:$0xff] %v894
        %959 = vst [vmem:[#allocation2 + $0x70] sm:$0xff] %v895
        %960 = vst [vmem:[#allocation2 + $0x78] sm:$0xff] %v896
        %961 = vst [vmem:[#allocation2 + $0x80] sm:$0xff] %v897
        %962 = vst [vmem:[#allocation2 + $0x88] sm:$0xff] %v898
        %963 = vst [vmem:[#allocation2 + $0x90] sm:$0xff] %v899
        %964 = vst [vmem:[#allocation2 + $0x98] sm:$0xff] %v900
        %965 = vst [vmem:[#allocation2 + $0xa0] sm:$0xff] %v901
        %966 = vst [vmem:[#allocation2 + $0xa8] sm:$0xff] %v902
        %967 = vst [vmem:[#allocation2 + $0xb0] sm:$0xff] %v903
        %968 = vst [vmem:[#allocation2 + $0xb8] sm:$0xff] %v904
        %969 = vst [vmem:[#allocation2 + $0xc0] sm:$0xff] %v905
        %970 = vst [vmem:[#allocation2 + $0xc8] sm:$0xff] %v906
        %971 = vst [vmem:[#allocation2 + $0xd0] sm:$0xff] %v907
        %972 = vst [vmem:[#allocation2 + $0xd8] sm:$0xff] %v908
        %973 = vst [vmem:[#allocation2 + $0xe0] sm:$0xff] %v909
        %974 = vst [vmem:[#allocation2 + $0xe8] sm:$0xff] %v910
        %975 = vst [vmem:[#allocation2 + $0xf0] sm:$0xff] %v911
        %976 = vst [vmem:[#allocation2 + $0xf8] sm:$0xff] %v912
        %977 = vst [vmem:[#allocation2 + $0x100] sm:$0xff] %v913
        %978 = vst [vmem:[#allocation2 + $0x108] sm:$0xff] %v914
        %979 = vst [vmem:[#allocation2 + $0x110] sm:$0xff] %v915
        %980 = vst [vmem:[#allocation2 + $0x118] sm:$0xff] %v916
        %981 = vst [vmem:[#allocation2 + $0x120] sm:$0xff] %v917
        %982 = vst [vmem:[#allocation2 + $0x128] sm:$0xff] %v918
        %983 = vst [vmem:[#allocation2 + $0x130] sm:$0xff] %v919
        %984 = vst [vmem:[#allocation2 + $0x138] sm:$0xff] %v920
        %985 = vst [vmem:[#allocation2 + $0x140] sm:$0xff] %v921
        %986 = vst [vmem:[#allocation2 + $0x148] sm:$0xff] %v922
        %987 = vst [vmem:[#allocation2 + $0x150] sm:$0xff] %v923
        %988 = vst [vmem:[#allocation2 + $0x158] sm:$0xff] %v924
        %989 = vst [vmem:[#allocation2 + $0x160] sm:$0xff] %v925
        %990 = vst [vmem:[#allocation2 + $0x168] sm:$0xff] %v926
        %991 = vst [vmem:[#allocation2 + $0x170] sm:$0xff] %v927
        %992 = vst [vmem:[#allocation2 + $0x178] sm:$0xff] %v928
        %993 = vst [vmem:[#allocation2 + $0x180] sm:$0xff] %v929
        %994 = vst [vmem:[#allocation2 + $0x188] sm:$0xff] %v930
        %995 = vst [vmem:[#allocation2 + $0x190] sm:$0xff] %v931
        %996 = vst [vmem:[#allocation2 + $0x198] sm:$0xff] %v932
        %997 = vst [vmem:[#allocation2 + $0x1a0] sm:$0xff] %v933
        %998 = vst [vmem:[#allocation2 + $0x1a8] sm:$0xff] %v934
        %999 = vst [vmem:[#allocation2 + $0x1b0] sm:$0xff] %v935
        %1000 = vst [vmem:[#allocation2 + $0x1b8] sm:$0xff] %v936
        %1001 = vst [vmem:[#allocation2 + $0x1c0] sm:$0xff] %v937
        %1002 = vst [vmem:[#allocation2 + $0x1c8] sm:$0xff] %v938
        %1003 = vst [vmem:[#allocation2 + $0x1d0] sm:$0xff] %v939
        %1004 = vst [vmem:[#allocation2 + $0x1d8] sm:$0xff] %v940
        %1005 = vst [vmem:[#allocation2 + $0x1e0] sm:$0xff] %v941
        %1006 = vst [vmem:[#allocation2 + $0x1e8] sm:$0xff] %v942
        %1007 = vst [vmem:[#allocation2 + $0x1f0] sm:$0xff] %v943
        %1008 = vst [vmem:[#allocation2 + $0x1f8] sm:$0xff] %v944
        // Predicated region
        $region45: #{tpu_custom_call.1} parent=31 // pred_check
          %p1009 = pneg %p260
        $region46: #{tpu_custom_call.1} parent=31 // pred_check_branch
          %1011 = sbr.rel (%p1009) target = $region48
        $region47: #{tpu_custom_call.1} parent=31 // pred_region
          %v1012 = vld [vmem:[#allocation2] sm:$0xff]
          %v1013 = vld [vmem:[#allocation2 + $0x8] sm:$0xff]
          %v1014 = vld [vmem:[#allocation2 + $0x10] sm:$0xff]
          %v1015 = vld [vmem:[#allocation2 + $0x18] sm:$0xff]
          %v1016 = vld [vmem:[#allocation2 + $0x20] sm:$0xff]
          %v1017 = vld [vmem:[#allocation2 + $0x28] sm:$0xff]
          %v1018 = vld [vmem:[#allocation2 + $0x30] sm:$0xff]
          %v1019 = vld [vmem:[#allocation2 + $0x38] sm:$0xff]
          %v1020 = vld [vmem:[#allocation2 + $0x40] sm:$0xff]
          %v1021 = vld [vmem:[#allocation2 + $0x48] sm:$0xff]
          %v1022 = vld [vmem:[#allocation2 + $0x50] sm:$0xff]
          %v1023 = vld [vmem:[#allocation2 + $0x58] sm:$0xff]
          %v1024 = vld [vmem:[#allocation2 + $0x60] sm:$0xff]
          %v1025 = vld [vmem:[#allocation2 + $0x68] sm:$0xff]
          %v1026 = vld [vmem:[#allocation2 + $0x70] sm:$0xff]
          %v1027 = vld [vmem:[#allocation2 + $0x78] sm:$0xff]
          %v1028 = vld [vmem:[#allocation2 + $0x80] sm:$0xff]
          %v1029 = vld [vmem:[#allocation2 + $0x88] sm:$0xff]
          %v1030 = vld [vmem:[#allocation2 + $0x90] sm:$0xff]
          %v1031 = vld [vmem:[#allocation2 + $0x98] sm:$0xff]
          %v1032 = vld [vmem:[#allocation2 + $0xa0] sm:$0xff]
          %v1033 = vld [vmem:[#allocation2 + $0xa8] sm:$0xff]
          %v1034 = vld [vmem:[#allocation2 + $0xb0] sm:$0xff]
          %v1035 = vld [vmem:[#allocation2 + $0xb8] sm:$0xff]
          %v1036 = vld [vmem:[#allocation2 + $0xc0] sm:$0xff]
          %v1037 = vld [vmem:[#allocation2 + $0xc8] sm:$0xff]
          %v1038 = vld [vmem:[#allocation2 + $0xd0] sm:$0xff]
          %v1039 = vld [vmem:[#allocation2 + $0xd8] sm:$0xff]
          %v1040 = vld [vmem:[#allocation2 + $0xe0] sm:$0xff]
          %v1041 = vld [vmem:[#allocation2 + $0xe8] sm:$0xff]
          %v1042 = vld [vmem:[#allocation2 + $0xf0] sm:$0xff]
          %v1043 = vld [vmem:[#allocation2 + $0xf8] sm:$0xff]
          %v1044 = vld [vmem:[#allocation2 + $0x100] sm:$0xff]
          %v1045 = vld [vmem:[#allocation2 + $0x108] sm:$0xff]
          %v1046 = vld [vmem:[#allocation2 + $0x110] sm:$0xff]
          %v1047 = vld [vmem:[#allocation2 + $0x118] sm:$0xff]
          %v1048 = vld [vmem:[#allocation2 + $0x120] sm:$0xff]
          %v1049 = vld [vmem:[#allocation2 + $0x128] sm:$0xff]
          %v1050 = vld [vmem:[#allocation2 + $0x130] sm:$0xff]
          %v1051 = vld [vmem:[#allocation2 + $0x138] sm:$0xff]
          %v1052 = vld [vmem:[#allocation2 + $0x140] sm:$0xff]
          %v1053 = vld [vmem:[#allocation2 + $0x148] sm:$0xff]
          %v1054 = vld [vmem:[#allocation2 + $0x150] sm:$0xff]
          %v1055 = vld [vmem:[#allocation2 + $0x158] sm:$0xff]
          %v1056 = vld [vmem:[#allocation2 + $0x160] sm:$0xff]
          %v1057 = vld [vmem:[#allocation2 + $0x168] sm:$0xff]
          %v1058 = vld [vmem:[#allocation2 + $0x170] sm:$0xff]
          %v1059 = vld [vmem:[#allocation2 + $0x178] sm:$0xff]
          %v1060 = vld [vmem:[#allocation2 + $0x180] sm:$0xff]
          %v1061 = vld [vmem:[#allocation2 + $0x188] sm:$0xff]
          %v1062 = vld [vmem:[#allocation2 + $0x190] sm:$0xff]
          %v1063 = vld [vmem:[#allocation2 + $0x198] sm:$0xff]
          %v1064 = vld [vmem:[#allocation2 + $0x1a0] sm:$0xff]
          %v1065 = vld [vmem:[#allocation2 + $0x1a8] sm:$0xff]
          %v1066 = vld [vmem:[#allocation2 + $0x1b0] sm:$0xff]
          %v1067 = vld [vmem:[#allocation2 + $0x1b8] sm:$0xff]
          %v1068 = vld [vmem:[#allocation2 + $0x1c0] sm:$0xff]
          %v1069 = vld [vmem:[#allocation2 + $0x1c8] sm:$0xff]
          %v1070 = vld [vmem:[#allocation2 + $0x1d0] sm:$0xff]
          %v1071 = vld [vmem:[#allocation2 + $0x1d8] sm:$0xff]
          %v1072 = vld [vmem:[#allocation2 + $0x1e0] sm:$0xff]
          %v1073 = vld [vmem:[#allocation2 + $0x1e8] sm:$0xff]
          %v1074 = vld [vmem:[#allocation2 + $0x1f0] sm:$0xff]
          %v1075 = vld [vmem:[#allocation2 + $0x1f8] sm:$0xff]
          %v1076 = vld [vmem:[%s258] sm:$0x1]
          %v1078 = vperm.slane %v1076, 0
          %v1080 = vadd.f32 %v1012, %v1078
          %v1081 = vadd.f32 %v1013, %v1078
          %v1082 = vadd.f32 %v1014, %v1078
          %v1083 = vadd.f32 %v1015, %v1078
          %v1084 = vadd.f32 %v1016, %v1078
          %v1085 = vadd.f32 %v1017, %v1078
          %v1086 = vadd.f32 %v1018, %v1078
          %v1087 = vadd.f32 %v1019, %v1078
          %v1088 = vadd.f32 %v1020, %v1078
          %v1089 = vadd.f32 %v1021, %v1078
          %v1090 = vadd.f32 %v1022, %v1078
          %v1091 = vadd.f32 %v1023, %v1078
          %v1092 = vadd.f32 %v1024, %v1078
          %v1093 = vadd.f32 %v1025, %v1078
          %v1094 = vadd.f32 %v1026, %v1078
          %v1095 = vadd.f32 %v1027, %v1078
          %v1096 = vadd.f32 %v1028, %v1078
          %v1097 = vadd.f32 %v1029, %v1078
          %v1098 = vadd.f32 %v1030, %v1078
          %v1099 = vadd.f32 %v1031, %v1078
          %v1100 = vadd.f32 %v1032, %v1078
          %v1101 = vadd.f32 %v1033, %v1078
          %v1102 = vadd.f32 %v1034, %v1078
          %v1103 = vadd.f32 %v1035, %v1078
          %v1104 = vadd.f32 %v1036, %v1078
          %v1105 = vadd.f32 %v1037, %v1078
          %v1106 = vadd.f32 %v1038, %v1078
          %v1107 = vadd.f32 %v1039, %v1078
          %v1108 = vadd.f32 %v1040, %v1078
          %v1109 = vadd.f32 %v1041, %v1078
          %v1110 = vadd.f32 %v1042, %v1078
          %v1111 = vadd.f32 %v1043, %v1078
          %v1112 = vadd.f32 %v1044, %v1078
          %v1113 = vadd.f32 %v1045, %v1078
          %v1114 = vadd.f32 %v1046, %v1078
          %v1115 = vadd.f32 %v1047, %v1078
          %v1116 = vadd.f32 %v1048, %v1078
          %v1117 = vadd.f32 %v1049, %v1078
          %v1118 = vadd.f32 %v1050, %v1078
          %v1119 = vadd.f32 %v1051, %v1078
          %v1120 = vadd.f32 %v1052, %v1078
          %v1121 = vadd.f32 %v1053, %v1078
          %v1122 = vadd.f32 %v1054, %v1078
          %v1123 = vadd.f32 %v1055, %v1078
          %v1124 = vadd.f32 %v1056, %v1078
          %v1125 = vadd.f32 %v1057, %v1078
          %v1126 = vadd.f32 %v1058, %v1078
          %v1127 = vadd.f32 %v1059, %v1078
          %v1128 = vadd.f32 %v1060, %v1078
          %v1129 = vadd.f32 %v1061, %v1078
          %v1130 = vadd.f32 %v1062, %v1078
          %v1131 = vadd.f32 %v1063, %v1078
          %v1132 = vadd.f32 %v1064, %v1078
          %v1133 = vadd.f32 %v1065, %v1078
          %v1134 = vadd.f32 %v1066, %v1078
          %v1135 = vadd.f32 %v1067, %v1078
          %v1136 = vadd.f32 %v1068, %v1078
          %v1137 = vadd.f32 %v1069, %v1078
          %v1138 = vadd.f32 %v1070, %v1078
          %v1139 = vadd.f32 %v1071, %v1078
          %v1140 = vadd.f32 %v1072, %v1078
          %v1141 = vadd.f32 %v1073, %v1078
          %v1142 = vadd.f32 %v1074, %v1078
          %v1143 = vadd.f32 %v1075, %v1078
          %v1144 = vmax.f32 %v1080, 0.0
          %v1145 = vmax.f32 %v1081, 0.0
          %v1146 = vmax.f32 %v1082, 0.0
          %v1147 = vmax.f32 %v1083, 0.0
          %v1148 = vmax.f32 %v1084, 0.0
          %v1149 = vmax.f32 %v1085, 0.0
          %v1150 = vmax.f32 %v1086, 0.0
          %v1151 = vmax.f32 %v1087, 0.0
          %v1152 = vmax.f32 %v1088, 0.0
          %v1153 = vmax.f32 %v1089, 0.0
          %v1154 = vmax.f32 %v1090, 0.0
          %v1155 = vmax.f32 %v1091, 0.0
          %v1156 = vmax.f32 %v1092, 0.0
          %v1157 = vmax.f32 %v1093, 0.0
          %v1158 = vmax.f32 %v1094, 0.0
          %v1159 = vmax.f32 %v1095, 0.0
          %v1160 = vmax.f32 %v1096, 0.0
          %v1161 = vmax.f32 %v1097, 0.0
          %v1162 = vmax.f32 %v1098, 0.0
          %v1163 = vmax.f32 %v1099, 0.0
          %v1164 = vmax.f32 %v1100, 0.0
          %v1165 = vmax.f32 %v1101, 0.0
          %v1166 = vmax.f32 %v1102, 0.0
          %v1167 = vmax.f32 %v1103, 0.0
          %v1168 = vmax.f32 %v1104, 0.0
          %v1169 = vmax.f32 %v1105, 0.0
          %v1170 = vmax.f32 %v1106, 0.0
          %v1171 = vmax.f32 %v1107, 0.0
          %v1172 = vmax.f32 %v1108, 0.0
          %v1173 = vmax.f32 %v1109, 0.0
          %v1174 = vmax.f32 %v1110, 0.0
          %v1175 = vmax.f32 %v1111, 0.0
          %v1176 = vmax.f32 %v1112, 0.0
          %v1177 = vmax.f32 %v1113, 0.0
          %v1178 = vmax.f32 %v1114, 0.0
          %v1179 = vmax.f32 %v1115, 0.0
          %v1180 = vmax.f32 %v1116, 0.0
          %v1181 = vmax.f32 %v1117, 0.0
          %v1182 = vmax.f32 %v1118, 0.0
          %v1183 = vmax.f32 %v1119, 0.0
          %v1184 = vmax.f32 %v1120, 0.0
          %v1185 = vmax.f32 %v1121, 0.0
          %v1186 = vmax.f32 %v1122, 0.0
          %v1187 = vmax.f32 %v1123, 0.0
          %v1188 = vmax.f32 %v1124, 0.0
          %v1189 = vmax.f32 %v1125, 0.0
          %v1190 = vmax.f32 %v1126, 0.0
          %v1191 = vmax.f32 %v1127, 0.0
          %v1192 = vmax.f32 %v1128, 0.0
          %v1193 = vmax.f32 %v1129, 0.0
          %v1194 = vmax.f32 %v1130, 0.0
          %v1195 = vmax.f32 %v1131, 0.0
          %v1196 = vmax.f32 %v1132, 0.0
          %v1197 = vmax.f32 %v1133, 0.0
          %v1198 = vmax.f32 %v1134, 0.0
          %v1199 = vmax.f32 %v1135, 0.0
          %v1200 = vmax.f32 %v1136, 0.0
          %v1201 = vmax.f32 %v1137, 0.0
          %v1202 = vmax.f32 %v1138, 0.0
          %v1203 = vmax.f32 %v1139, 0.0
          %v1204 = vmax.f32 %v1140, 0.0
          %v1205 = vmax.f32 %v1141, 0.0
          %v1206 = vmax.f32 %v1142, 0.0
          %v1207 = vmax.f32 %v1143, 0.0
          %v1208 = vpack.c.bf16 %v1144, %v1144
          %v1209 = vpack.c.bf16 %v1145, %v1145
          %v1210 = vpack.c.bf16 %v1146, %v1146
          %v1211 = vpack.c.bf16 %v1147, %v1147
          %v1212 = vpack.c.bf16 %v1148, %v1148
          %v1213 = vpack.c.bf16 %v1149, %v1149
          %v1214 = vpack.c.bf16 %v1150, %v1150
          %v1215 = vpack.c.bf16 %v1151, %v1151
          %v1216 = vpack.c.bf16 %v1152, %v1152
          %v1217 = vpack.c.bf16 %v1153, %v1153
          %v1218 = vpack.c.bf16 %v1154, %v1154
          %v1219 = vpack.c.bf16 %v1155, %v1155
          %v1220 = vpack.c.bf16 %v1156, %v1156
          %v1221 = vpack.c.bf16 %v1157, %v1157
          %v1222 = vpack.c.bf16 %v1158, %v1158
          %v1223 = vpack.c.bf16 %v1159, %v1159
          %v1224 = vpack.c.bf16 %v1160, %v1160
          %v1225 = vpack.c.bf16 %v1161, %v1161
          %v1226 = vpack.c.bf16 %v1162, %v1162
          %v1227 = vpack.c.bf16 %v1163, %v1163
          %v1228 = vpack.c.bf16 %v1164, %v1164
          %v1229 = vpack.c.bf16 %v1165, %v1165
          %v1230 = vpack.c.bf16 %v1166, %v1166
          %v1231 = vpack.c.bf16 %v1167, %v1167
          %v1232 = vpack.c.bf16 %v1168, %v1168
          %v1233 = vpack.c.bf16 %v1169, %v1169
          %v1234 = vpack.c.bf16 %v1170, %v1170
          %v1235 = vpack.c.bf16 %v1171, %v1171
          %v1236 = vpack.c.bf16 %v1172, %v1172
          %v1237 = vpack.c.bf16 %v1173, %v1173
          %v1238 = vpack.c.bf16 %v1174, %v1174
          %v1239 = vpack.c.bf16 %v1175, %v1175
          %v1240 = vpack.c.bf16 %v1176, %v1176
          %v1241 = vpack.c.bf16 %v1177, %v1177
          %v1242 = vpack.c.bf16 %v1178, %v1178
          %v1243 = vpack.c.bf16 %v1179, %v1179
          %v1244 = vpack.c.bf16 %v1180, %v1180
          %v1245 = vpack.c.bf16 %v1181, %v1181
          %v1246 = vpack.c.bf16 %v1182, %v1182
          %v1247 = vpack.c.bf16 %v1183, %v1183
          %v1248 = vpack.c.bf16 %v1184, %v1184
          %v1249 = vpack.c.bf16 %v1185, %v1185
          %v1250 = vpack.c.bf16 %v1186, %v1186
          %v1251 = vpack.c.bf16 %v1187, %v1187
          %v1252 = vpack.c.bf16 %v1188, %v1188
          %v1253 = vpack.c.bf16 %v1189, %v1189
          %v1254 = vpack.c.bf16 %v1190, %v1190
          %v1255 = vpack.c.bf16 %v1191, %v1191
          %v1256 = vpack.c.bf16 %v1192, %v1192
          %v1257 = vpack.c.bf16 %v1193, %v1193
          %v1258 = vpack.c.bf16 %v1194, %v1194
          %v1259 = vpack.c.bf16 %v1195, %v1195
          %v1260 = vpack.c.bf16 %v1196, %v1196
          %v1261 = vpack.c.bf16 %v1197, %v1197
          %v1262 = vpack.c.bf16 %v1198, %v1198
          %v1263 = vpack.c.bf16 %v1199, %v1199
          %v1264 = vpack.c.bf16 %v1200, %v1200
          %v1265 = vpack.c.bf16 %v1201, %v1201
          %v1266 = vpack.c.bf16 %v1202, %v1202
          %v1267 = vpack.c.bf16 %v1203, %v1203
          %v1268 = vpack.c.bf16 %v1204, %v1204
          %v1269 = vpack.c.bf16 %v1205, %v1205
          %v1270 = vpack.c.bf16 %v1206, %v1206
          %v1271 = vpack.c.bf16 %v1207, %v1207
          %1272 = vst [vmem:[%s253] sm:$0xf] %v1208
          %1273 = vst [vmem:[%s253 + $0x4] sm:$0xf] %v1209
          %1274 = vst [vmem:[%s253 + $0x8] sm:$0xf] %v1210
          %1275 = vst [vmem:[%s253 + $0xc] sm:$0xf] %v1211
          %1276 = vst [vmem:[%s253 + $0x10] sm:$0xf] %v1212
          %1277 = vst [vmem:[%s253 + $0x14] sm:$0xf] %v1213
          %1278 = vst [vmem:[%s253 + $0x18] sm:$0xf] %v1214
          %1279 = vst [vmem:[%s253 + $0x1c] sm:$0xf] %v1215
          %1280 = vst [vmem:[%s253 + $0x20] sm:$0xf] %v1216
          %1281 = vst [vmem:[%s253 + $0x24] sm:$0xf] %v1217
          %1282 = vst [vmem:[%s253 + $0x28] sm:$0xf] %v1218
          %1283 = vst [vmem:[%s253 + $0x2c] sm:$0xf] %v1219
          %1284 = vst [vmem:[%s253 + $0x30] sm:$0xf] %v1220
          %1285 = vst [vmem:[%s253 + $0x34] sm:$0xf] %v1221
          %1286 = vst [vmem:[%s253 + $0x38] sm:$0xf] %v1222
          %1287 = vst [vmem:[%s253 + $0x3c] sm:$0xf] %v1223
          %1288 = vst [vmem:[%s253 + $0x40] sm:$0xf] %v1224
          %1289 = vst [vmem:[%s253 + $0x44] sm:$0xf] %v1225
          %1290 = vst [vmem:[%s253 + $0x48] sm:$0xf] %v1226
          %1291 = vst [vmem:[%s253 + $0x4c] sm:$0xf] %v1227
          %1292 = vst [vmem:[%s253 + $0x50] sm:$0xf] %v1228
          %1293 = vst [vmem:[%s253 + $0x54] sm:$0xf] %v1229
          %1294 = vst [vmem:[%s253 + $0x58] sm:$0xf] %v1230
          %1295 = vst [vmem:[%s253 + $0x5c] sm:$0xf] %v1231
          %1296 = vst [vmem:[%s253 + $0x60] sm:$0xf] %v1232
          %1297 = vst [vmem:[%s253 + $0x64] sm:$0xf] %v1233
          %1298 = vst [vmem:[%s253 + $0x68] sm:$0xf] %v1234
          %1299 = vst [vmem:[%s253 + $0x6c] sm:$0xf] %v1235
          %1300 = vst [vmem:[%s253 + $0x70] sm:$0xf] %v1236
          %1301 = vst [vmem:[%s253 + $0x74] sm:$0xf] %v1237
          %1302 = vst [vmem:[%s253 + $0x78] sm:$0xf] %v1238
          %1303 = vst [vmem:[%s253 + $0x7c] sm:$0xf] %v1239
          %1304 = vst [vmem:[%s253 + $0x80] sm:$0xf] %v1240
          %1305 = vst [vmem:[%s253 + $0x84] sm:$0xf] %v1241
          %1306 = vst [vmem:[%s253 + $0x88] sm:$0xf] %v1242
          %1307 = vst [vmem:[%s253 + $0x8c] sm:$0xf] %v1243
          %1308 = vst [vmem:[%s253 + $0x90] sm:$0xf] %v1244
          %1309 = vst [vmem:[%s253 + $0x94] sm:$0xf] %v1245
          %1310 = vst [vmem:[%s253 + $0x98] sm:$0xf] %v1246
          %1311 = vst [vmem:[%s253 + $0x9c] sm:$0xf] %v1247
          %1312 = vst [vmem:[%s253 + $0xa0] sm:$0xf] %v1248
          %1313 = vst [vmem:[%s253 + $0xa4] sm:$0xf] %v1249
          %1314 = vst [vmem:[%s253 + $0xa8] sm:$0xf] %v1250
          %1315 = vst [vmem:[%s253 + $0xac] sm:$0xf] %v1251
          %1316 = vst [vmem:[%s253 + $0xb0] sm:$0xf] %v1252
          %1317 = vst [vmem:[%s253 + $0xb4] sm:$0xf] %v1253
          %1318 = vst [vmem:[%s253 + $0xb8] sm:$0xf] %v1254
          %1319 = vst [vmem:[%s253 + $0xbc] sm:$0xf] %v1255
          %1320 = vst [vmem:[%s253 + $0xc0] sm:$0xf] %v1256
          %1321 = vst [vmem:[%s253 + $0xc4] sm:$0xf] %v1257
          %1322 = vst [vmem:[%s253 + $0xc8] sm:$0xf] %v1258
          %1323 = vst [vmem:[%s253 + $0xcc] sm:$0xf] %v1259
          %1324 = vst [vmem:[%s253 + $0xd0] sm:$0xf] %v1260
          %1325 = vst [vmem:[%s253 + $0xd4] sm:$0xf] %v1261
          %1326 = vst [vmem:[%s253 + $0xd8] sm:$0xf] %v1262
          %1327 = vst [vmem:[%s253 + $0xdc] sm:$0xf] %v1263
          %1328 = vst [vmem:[%s253 + $0xe0] sm:$0xf] %v1264
          %1329 = vst [vmem:[%s253 + $0xe4] sm:$0xf] %v1265
          %1330 = vst [vmem:[%s253 + $0xe8] sm:$0xf] %v1266
          %1331 = vst [vmem:[%s253 + $0xec] sm:$0xf] %v1267
          %1332 = vst [vmem:[%s253 + $0xf0] sm:$0xf] %v1268
          %1333 = vst [vmem:[%s253 + $0xf4] sm:$0xf] %v1269
          %1334 = vst [vmem:[%s253 + $0xf8] sm:$0xf] %v1270
          %1335 = vst [vmem:[%s253 + $0xfc] sm:$0xf] %v1271
        $region48: #{tpu_custom_call.1} parent=31 // pred_fallthru
          _
        %s1336 = sand.u32 %s132, 1
        %s1337 = scalar_lea.sflag [#allocation5], %s1336
        %s1338 = sand.u32 %s132, 1
        %s1339 = smul.addr %s1338, 256
        %s1340 = scalar_lea.vmem [#allocation8], %s1339
        // Predicated region
        $region49: #{tpu_custom_call.1} parent=31 // pred_check
          %p1341 = pneg %p142
        $region50: #{tpu_custom_call.1} parent=31 // pred_check_branch
          %1343 = sbr.rel (%p1341) target = $region52
        $region51: #{tpu_custom_call.1} parent=31 // pred_region
          %s1344 = smul.u32 64, %s26
          %1346 = vsyncadd %s1337, 0
          %s1347 = sadd.s32 %s27, %s1344
          %s1348 = smul.addr %s1347, 4
          %s1349 = scalar_lea.hbm %s3, %s1348
          %s1350 = sshll.u32 %s1340, 4
          %s1351 = int_to_ptr.vmem [resolvable:$true] %s1350
          %s1352 = sshll.u32 %s1349, 4
          %s1353 = int_to_ptr.hbm [resolvable:$true] %s1352
          %1358 = dma.vmem_to_hbm [thread:$0]  %s1351, 4096, %s1353, %s1337, 64, 64, 4
        $region52: #{tpu_custom_call.1} parent=31 // pred_fallthru
          _
      $region32: #{tpu_custom_call.1} parent=5 // pred_fallthru
        _
      %p1359 = scmp.le.s32.totalorder 2, %s16
      // Predicated region
      $region53: #{tpu_custom_call.1} parent=5 // pred_check
        %p1360 = pneg %p1359
      $region54: #{tpu_custom_call.1} parent=5 // pred_check_branch
        %1362 = sbr.rel (%p1360) target = $region56
      $region55: #{tpu_custom_call.1} parent=5 // pred_region
        %s1363 = ssub.s32 %s16, 2
        // Predicated region
        $region57: #{tpu_custom_call.1} parent=55 // pred_check
          %p1364 = pneg %p148
        $region58: #{tpu_custom_call.1} parent=55 // pred_check_branch
          %1366 = sbr.rel (%p1364) target = $region60
        $region59: #{tpu_custom_call.1} parent=55 // pred_region
          %s1367 = sand.u32 %s133, 1
          %s1368 = scalar_lea.sflag [#allocation5], %s1367
          %s1369 = sand.u32 %s133, 1
          %s1370 = smul.addr %s1369, 256
          %s1371 = scalar_lea.vmem [#allocation8], %s1370
          %1373 = dma.done %s1368, 4096
        $region60: #{tpu_custom_call.1} parent=55 // pred_fallthru
          _
      $region56: #{tpu_custom_call.1} parent=5 // pred_fallthru
        _
    $region6: #{tpu_custom_call.1} parent=1 // loop_footer
      %s20 = sadd.s32 1, %s16
    $region7: #{tpu_custom_call.1} parent=1 // loop_footer_branch
      %15 = sbr.rel target = $region3
    $region8: #{tpu_custom_call.1} parent=1 // loop_exit
      _
    %1374 = vsyncpa [#allocation4], 1
    %s1375 = scalar_lea.sflag [#allocation4], 1
    %1376 = vsyncpa %s1375, 1
    %1377 = vsyncpa [#allocation7], 1
    %1378 = vsyncpa [#allocation5], 1
    %s1379 = scalar_lea.sflag [#allocation5], 1
    %1380 = vsyncpa %s1379, 1

</llo_original>
